<compile_context>
chip_gen: v6e
topology: v6e:2x2x1
jax: 0.10.0
libtpu: 0.0.40
codegen_flags: <defaults>
</compile_context>

<pallas_src>
import functools
import math

import jax
import jax.numpy as jnp
from jax.experimental import pallas as pl
from jax.experimental.pallas import tpu as pltpu


# ----------------------------- in-kernel helpers -----------------------------

def _layer_norm(x, gamma, beta, eps=1e-5):
    """x: (M, D) f32, gamma/beta: (1, D) f32.  Matches nn.LayerNorm(eps=1e-5)."""
    mu = jnp.mean(x, axis=-1, keepdims=True)
    xc = x - mu
    var = jnp.mean(xc * xc, axis=-1, keepdims=True)
    return xc * jax.lax.rsqrt(var + eps) * gamma + beta


# ----------------------------- fused encoder-layer kernel -----------------------------

def _encoder_layer_kernel(*refs, nhead, has_pos):
    if has_pos:
        src_ref, pos_ref = refs[0], refs[1]
        rest = refs[2:]
    else:
        src_ref, pos_ref = refs[0], None
        rest = refs[1:]
    (wqk_ref, wv_ref, wo_ref,
     bq_ref, bv_ref, bo_ref,
     w1_ref, b1_ref, w2_ref, b2_ref,
     g1_ref, be1_ref, g2_ref, be2_ref,
     out_ref, o_scratch) = rest

    blk_b, T, D = src_ref.shape          # one block = blk_b full batch elements
    dh = D // nhead
    M = blk_b * T                        # rows fed to the MXU per grid step

    src_bf = src_ref[...]                                    # (blk_b, T, D) bf16
    src_f32 = src_bf.astype(jnp.float32).reshape(M, D)       # residual / LN path

    # q = k = src + pos ; value = src  (bf16 matmul operands, f32 accumulation)
    if has_pos:
        pos_f32 = pos_ref[...].astype(jnp.float32).reshape(M, D)
        x_qk = (src_f32 + pos_f32).astype(jnp.bfloat16)
    else:
        x_qk = src_bf.reshape(M, D)
    x_v = src_bf.reshape(M, D)

    # ---- multi-head self-attention: full-width projections ----
    # wqk is (D, 2D) with 1/sqrt(dh) folded into the Q half; K bias is dropped
    # (softmax is invariant to a per-row constant shift).
    qk = jnp.dot(x_qk, wqk_ref[...], preferred_element_type=jnp.float32)   # (M, 2D)
    q = qk[:, :D] + bq_ref[...]
    k = qk[:, D:]
    v = jnp.dot(x_v, wv_ref[...], preferred_element_type=jnp.float32) + bv_ref[...]

    # Per-head scores / softmax / PV; head outputs land at their lane offset in a
    # VMEM scratch so the out-projection is a single full-width (M,D)x(D,D) matmul.
    for h in range(nhead):               # small static unroll over heads
        lo, hi = h * dh, (h + 1) * dh
        qh = q[:, lo:hi].reshape(blk_b, T, dh).astype(jnp.bfloat16)
        kh = k[:, lo:hi].reshape(blk_b, T, dh).astype(jnp.bfloat16)
        vh = v[:, lo:hi].reshape(blk_b, T, dh).astype(jnp.bfloat16)

        s = jnp.einsum('btd,bsd->bts', qh, kh, preferred_element_type=jnp.float32)
        s = s - jnp.max(s, axis=-1, keepdims=True)
        p = jnp.exp(s)
        p = p * pl.reciprocal(jnp.sum(p, axis=-1, keepdims=True), approx=True)
        oh = jnp.einsum('bts,bsd->btd', p.astype(jnp.bfloat16), vh,
                        preferred_element_type=jnp.float32)                 # (blk_b, T, dh)
        o_scratch[:, lo:hi] = oh.reshape(M, dh).astype(o_scratch.dtype)

    attn = jnp.dot(o_scratch[...], wo_ref[...],
                   preferred_element_type=jnp.float32) + bo_ref[...]

    # residual + norm1   (dropout1 = identity)
    x = _layer_norm(src_f32 + attn, g1_ref[...], be1_ref[...])

    # ---- feed-forward: linear2(relu(linear1(x))), dropout = identity ----
    h1 = jnp.dot(x.astype(jnp.bfloat16), w1_ref[...],
                 preferred_element_type=jnp.float32) + b1_ref[...]
    h1 = jnp.maximum(h1, 0.0)
    ff = jnp.dot(h1.astype(jnp.bfloat16), w2_ref[...],
                 preferred_element_type=jnp.float32) + b2_ref[...]

    y = _layer_norm(x + ff, g2_ref[...], be2_ref[...])
    out_ref[...] = y.reshape(blk_b, T, D).astype(out_ref.dtype)


# ----------------------------- wrapper helpers -----------------------------

def _vmem_limit_bytes():
    """Derive the scoped-VMEM budget from the actual chip (v7x: 64 MiB/TC)."""
    try:
        cap = int(pltpu.get_tpu_info().vmem_capacity_bytes)
    except Exception:
        cap = 64 << 20                      # conservative fallback (v7x-sized)
    return int(min(cap * 3 // 4, 100 << 20))


def _pick_block_b(B, T, D, F, nhead, has_pos, out_itemsize, vmem_limit, weight_bytes):
    """Largest divisor of B whose estimated VMEM footprint fits the budget.
    Small-VMEM chips (v7x) get a smaller M target and prefer >=2 grid steps (2 TCs)."""
    divs = [c for c in range(1, B + 1) if B % c == 0]

    def block_bytes(bb):
        M = bb * T
        io = 2 * M * D * 2 * (2 if has_pos else 1) + 2 * M * D * out_itemsize   # dbl-buffered IO
        inter = M * (12 * D + 3 * F) * 4 + nhead * bb * T * T * 8               # rough f32 live set
        return io + inter

    budget = max(vmem_limit - weight_bytes - (6 << 20), 1 << 20)   # headroom for scratch
    small_vmem = vmem_limit <= (48 << 20)                          # v7x-class chip
    m_cap = 256 if small_vmem else 1024

    fitting = [c for c in divs if block_bytes(c) <= budget and c * T <= max(m_cap, T)]
    if not fitting:
        fitting = [1]
    blk = max(fitting)
    if small_vmem and B // blk < 2:        # keep both v7x TensorCores busy when possible
        alts = [c for c in fitting if B // c >= 2]
        if alts:
            blk = max(alts)
    return blk


# ----------------------------- wrapper -----------------------------

def transformer_encoder_layer(src, params, *, nhead, pos=None,
                              src_mask=None, src_key_padding_mask=None,
                              out_dtype=None, kernel_out_dtype=jnp.bfloat16):
    """src: (T, B, D), pos: (T, B, D) — PyTorch seq-first convention.  Returns (T, B, D)."""
    assert src_mask is None and src_key_padding_mask is None  # TODO(synk): masks unsupported
    T, B, D = src.shape
    assert D % nhead == 0
    assert T % 8 == 0, "pad the sequence length to a multiple of 8 (TPU sublane tile)"
    dh = D // nhead
    F = params["lin1_w"].shape[0]
    has_pos = pos is not None
    out_dtype = src.dtype if out_dtype is None else out_dtype

    # ---- batch-first + bf16 (single fused transpose+cast per activation) ----
    src_b = jnp.transpose(src, (1, 0, 2)).astype(jnp.bfloat16)   # (B, T, D)
    pos_b = jnp.transpose(pos, (1, 0, 2)).astype(jnp.bfloat16) if has_pos else None

    # ---- trace-time weight preprocessing: transpose to (D_in, D_out), fuse Q|K,
    #      fold 1/sqrt(dh) into the Q projection, drop the (cancelling) K bias ----
    scale = 1.0 / math.sqrt(dh)
    in_w = params["in_proj_w"].astype(jnp.float32)   # (3D, D)  [PyTorch layout]
    in_b = params["in_proj_b"].astype(jnp.float32)   # (3D,)

    wqk = jnp.concatenate([in_w[:D].T * scale, in_w[D:2 * D].T], axis=1).astype(jnp.bfloat16)
    wv_t = in_w[2 * D:].T.astype(jnp.bfloat16)                       # (D, D)
    bq = (in_b[:D] * scale).reshape(1, D).astype(jnp.float32)
    bv = in_b[2 * D:].reshape(1, D).astype(jnp.float32)

    wo_t = params["out_proj_w"].T.astype(jnp.bfloat16)               # (D, D)
    bo = params["out_proj_b"].reshape(1, D).astype(jnp.float32)

    w1t = params["lin1_w"].T.astype(jnp.bfloat16)                    # (D, F)
    b1 = params["lin1_b"].reshape(1, F).astype(jnp.float32)
    w2t = params["lin2_w"].T.astype(jnp.bfloat16)                    # (F, D)
    b2 = params["lin2_b"].reshape(1, D).astype(jnp.float32)

    g1 = params["ln1_g"].reshape(1, D).astype(jnp.float32)
    be1 = params["ln1_b"].reshape(1, D).astype(jnp.float32)
    g2 = params["ln2_g"].reshape(1, D).astype(jnp.float32)
    be2 = params["ln2_b"].reshape(1, D).astype(jnp.float32)

    weights = (wqk, wv_t, wo_t, bq, bv, bo, w1t, b1, w2t, b2, g1, be1, g2, be2)
    weight_bytes = sum(int(w.size) * w.dtype.itemsize for w in weights)

    vmem_limit = _vmem_limit_bytes()
    out_itemsize = jnp.dtype(kernel_out_dtype).itemsize
    blk_b = _pick_block_b(B, T, D, F, nhead, has_pos, out_itemsize, vmem_limit, weight_bytes)
    grid = (B // blk_b,)

    act_spec = pl.BlockSpec((blk_b, T, D), lambda i: (i, 0, 0))

    def w_spec(w):
        zeros = (0,) * w.ndim
        # constant index_map -> loaded once; single-buffer to halve weight VMEM
        return pl.BlockSpec(w.shape, lambda i: zeros, pipeline_mode=pl.Buffered(1))

    acts = (src_b, pos_b) if has_pos else (src_b,)
    act_specs = [act_spec] * len(acts)

    n_in_elems = B * T * D * (2 if has_pos else 1)
    cost = pl.CostEstimate(
        flops=int(2 * B * T * D * (4 * D + 2 * T + 2 * F)),
        transcendentals=int(B * nhead * T * T),
        bytes_accessed=int(n_in_elems * 2 + B * T * D * out_itemsize + weight_bytes),
    )

    out_btd = pl.pallas_call(
        functools.partial(_encoder_layer_kernel, nhead=nhead, has_pos=has_pos),
        out_shape=jax.ShapeDtypeStruct((B, T, D), kernel_out_dtype),
        grid_spec=pltpu.PrefetchScalarGridSpec(
            num_scalar_prefetch=0,
            grid=grid,
            in_specs=act_specs + [w_spec(w) for w in weights],
            out_specs=pl.BlockSpec((blk_b, T, D), lambda i: (i, 0, 0)),
            scratch_shapes=[pltpu.VMEM((blk_b * T, D), jnp.bfloat16)],   # concat'd head outputs
        ),
        compiler_params=pltpu.CompilerParams(
            dimension_semantics=("parallel",),
            vmem_limit_bytes=int(vmem_limit),
        ),
        cost_estimate=cost,
    )(*acts, *weights)

    return jnp.transpose(out_btd, (1, 0, 2)).astype(out_dtype)   # back to (T, B, D)


# ----------------------------- pure-JAX reference (for sanity check) -----------------------------

def _reference(src, pos, params, nhead):
    T, B, D = src.shape
    dh = D // nhead
    x = src + pos
    in_w, in_b = params["in_proj_w"], params["in_proj_b"]
    q = (x @ in_w[:D].T + in_b[:D]) * (dh ** -0.5)
    k = x @ in_w[D:2 * D].T + in_b[D:2 * D]
    v = src @ in_w[2 * D:].T + in_b[2 * D:]

    def split(t):   # (T, B, D) -> (B, nhead, T, dh)
        return t.reshape(T, B, nhead, dh).transpose(1, 2, 0, 3)

    qh, kh, vh = split(q), split(k), split(v)
    s = jnp.einsum('bhtd,bhsd->bhts', qh, kh)
    p = jax.nn.softmax(s, axis=-1)
    o = jnp.einsum('bhts,bhsd->bhtd', p, vh).transpose(2, 0, 1, 3).reshape(T, B, D)
    attn = o @ params["out_proj_w"].T + params["out_proj_b"]

    def ln(y, g, b):
        mu = y.mean(-1, keepdims=True)
        var = ((y - mu) ** 2).mean(-1, keepdims=True)
        return (y - mu) / jnp.sqrt(var + 1e-5) * g + b

    x1 = ln(src + attn, params["ln1_g"], params["ln1_b"])
    h = jax.nn.relu(x1 @ params["lin1_w"].T + params["lin1_b"])
    ff = h @ params["lin2_w"].T + params["lin2_b"]
    return ln(x1 + ff, params["ln2_g"], params["ln2_b"])


# ----------------------------- deterministic parameter init -----------------------------

def init_params(key, d_model, nhead, dim_feedforward):
    D, Fh = d_model, dim_feedforward
    ks = jax.random.split(key, 8)
    s = 0.05

    def nrm(k, shape):
        return jax.random.normal(k, shape, dtype=jnp.float32) * s

    return {
        "in_proj_w": nrm(ks[0], (3 * D, D)),
        "in_proj_b": nrm(ks[1], (3 * D,)),
        "out_proj_w": nrm(ks[2], (D, D)),
        "out_proj_b": nrm(ks[3], (D,)),
        "lin1_w": nrm(ks[4], (Fh, D)),
        "lin1_b": nrm(ks[5], (Fh,)),
        "lin2_w": nrm(ks[6], (D, Fh)),
        "lin2_b": nrm(ks[7], (D,)),
        "ln1_g": jnp.ones((D,), jnp.float32), "ln1_b": jnp.zeros((D,), jnp.float32),
        "ln2_g": jnp.ones((D,), jnp.float32), "ln2_b": jnp.zeros((D,), jnp.float32),
    }


# ----------------------------- main -----------------------------

if __name__ == "__main__":
    d_model, nhead, dim_ff = 32, 4, 64
    T, B = 8, 2

    key = jax.random.PRNGKey(0)
    k_src, k_pos, k_par = jax.random.split(key, 3)

    src = jax.random.normal(k_src, (T, B, d_model), dtype=jnp.float32)
    pos = jax.random.normal(k_pos, (T, B, d_model), dtype=jnp.float32)
    params = init_params(k_par, d_model, nhead, dim_ff)

    # main path (with positional embedding)
    out = transformer_encoder_layer(src, params, nhead=nhead, pos=pos)
    jax.block_until_ready(out)
    assert out.shape == (T, B, d_model)
    assert out.dtype == src.dtype
    assert bool(jnp.all(jnp.isfinite(out)))

    ref = _reference(src, pos, params, nhead)
    max_abs = float(jnp.max(jnp.abs(out - ref)))
    rel = float(jnp.linalg.norm(out - ref) / (jnp.linalg.norm(ref) + 1e-12))
    assert max_abs < 0.15, f"max abs err {max_abs}"          # bf16 operands / bf16 output
    assert rel < 0.05, f"relative (Frobenius) err {rel}"

    # specialized pos=None path (no zero-filled pos stream)
    out_np = transformer_encoder_layer(src, params, nhead=nhead, pos=None)
    jax.block_until_ready(out_np)
    ref_np = _reference(src, jnp.zeros_like(src), params, nhead)
    assert float(jnp.max(jnp.abs(out_np - ref_np))) < 0.15

    print("KERNEL_OK")
</pallas_src>

<mosaic_0001>
module attributes {stable_mosaic.version = 11 : i64} {
  func.func @_encoder_layer_kernel(%arg0: i32, %arg1: memref<1x8x32xbf16, #tpu.memory_space<vmem>>, %arg2: memref<1x8x32xbf16, #tpu.memory_space<vmem>>, %arg3: memref<32x64xbf16, #tpu.memory_space<vmem>>, %arg4: memref<32x32xbf16, #tpu.memory_space<vmem>>, %arg5: memref<32x32xbf16, #tpu.memory_space<vmem>>, %arg6: memref<1x32xf32, #tpu.memory_space<vmem>>, %arg7: memref<1x32xf32, #tpu.memory_space<vmem>>, %arg8: memref<1x32xf32, #tpu.memory_space<vmem>>, %arg9: memref<32x64xbf16, #tpu.memory_space<vmem>>, %arg10: memref<1x64xf32, #tpu.memory_space<vmem>>, %arg11: memref<64x32xbf16, #tpu.memory_space<vmem>>, %arg12: memref<1x32xf32, #tpu.memory_space<vmem>>, %arg13: memref<1x32xf32, #tpu.memory_space<vmem>>, %arg14: memref<1x32xf32, #tpu.memory_space<vmem>>, %arg15: memref<1x32xf32, #tpu.memory_space<vmem>>, %arg16: memref<1x32xf32, #tpu.memory_space<vmem>>, %arg17: memref<1x8x32xbf16, #tpu.memory_space<vmem>>, %arg18: memref<8x32xbf16, #tpu.memory_space<vmem>>) attributes {dimension_semantics = [#tpu.dimension_semantics<parallel>], iteration_bounds = array<i64: 2>, scalar_prefetch = 0 : i64, scratch_operands = 1 : i64, tpu.core_type = #tpu.core_type<tc>, window_params = [{transform_indices = @transform_0, window_bounds = array<i64: 1, 8, 32>}, {transform_indices = @transform_1, window_bounds = array<i64: 1, 8, 32>}, {pipeline_mode = #tpu.pipeline_mode<synchronous>, transform_indices = @transform_2, window_bounds = array<i64: 32, 64>}, {pipeline_mode = #tpu.pipeline_mode<synchronous>, transform_indices = @transform_3, window_bounds = array<i64: 32, 32>}, {pipeline_mode = #tpu.pipeline_mode<synchronous>, transform_indices = @transform_4, window_bounds = array<i64: 32, 32>}, {pipeline_mode = #tpu.pipeline_mode<synchronous>, transform_indices = @transform_5, window_bounds = array<i64: 1, 32>}, {pipeline_mode = #tpu.pipeline_mode<synchronous>, transform_indices = @transform_6, window_bounds = array<i64: 1, 32>}, {pipeline_mode = #tpu.pipeline_mode<synchronous>, transform_indices = @transform_7, window_bounds = array<i64: 1, 32>}, {pipeline_mode = #tpu.pipeline_mode<synchronous>, transform_indices = @transform_8, window_bounds = array<i64: 32, 64>}, {pipeline_mode = #tpu.pipeline_mode<synchronous>, transform_indices = @transform_9, window_bounds = array<i64: 1, 64>}, {pipeline_mode = #tpu.pipeline_mode<synchronous>, transform_indices = @transform_10, window_bounds = array<i64: 64, 32>}, {pipeline_mode = #tpu.pipeline_mode<synchronous>, transform_indices = @transform_11, window_bounds = array<i64: 1, 32>}, {pipeline_mode = #tpu.pipeline_mode<synchronous>, transform_indices = @transform_12, window_bounds = array<i64: 1, 32>}, {pipeline_mode = #tpu.pipeline_mode<synchronous>, transform_indices = @transform_13, window_bounds = array<i64: 1, 32>}, {pipeline_mode = #tpu.pipeline_mode<synchronous>, transform_indices = @transform_14, window_bounds = array<i64: 1, 32>}, {pipeline_mode = #tpu.pipeline_mode<synchronous>, transform_indices = @transform_15, window_bounds = array<i64: 1, 32>}, {transform_indices = @transform_16, window_bounds = array<i64: 1, 8, 32>}]} {
    %c0 = arith.constant 0 : index
    %c0_0 = arith.constant 0 : index
    %c0_1 = arith.constant 0 : index
    %0 = vector.load %arg1[%c0, %c0_0, %c0_1] : memref<1x8x32xbf16, #tpu.memory_space<vmem>>, vector<1x8x32xbf16>
    %1 = arith.extf %0 : vector<1x8x32xbf16> to vector<1x8x32xf32>
    %2 = vector.shape_cast %1 : vector<1x8x32xf32> to vector<8x32xf32>
    %c0_2 = arith.constant 0 : index
    %c0_3 = arith.constant 0 : index
    %c0_4 = arith.constant 0 : index
    %3 = vector.load %arg2[%c0_2, %c0_3, %c0_4] : memref<1x8x32xbf16, #tpu.memory_space<vmem>>, vector<1x8x32xbf16>
    %4 = arith.extf %3 : vector<1x8x32xbf16> to vector<1x8x32xf32>
    %5 = vector.shape_cast %4 : vector<1x8x32xf32> to vector<8x32xf32>
    %6 = arith.addf %2, %5 : vector<8x32xf32>
    %7 = arith.truncf %6 : vector<8x32xf32> to vector<8x32xbf16>
    %8 = vector.shape_cast %0 : vector<1x8x32xbf16> to vector<8x32xbf16>
    %c0_5 = arith.constant 0 : index
    %c0_6 = arith.constant 0 : index
    %9 = vector.load %arg3[%c0_5, %c0_6] : memref<32x64xbf16, #tpu.memory_space<vmem>>, vector<32x64xbf16>
    %cst = arith.constant dense<0.000000e+00> : vector<8x64xf32>
    %10 = tpu.matmul %7, %9, %cst {dimension_numbers = #tpu.dot_dimension_numbers<[1], [0], [0], [1], [0, 0, 1, 1], [], []>} : vector<8x32xbf16>, vector<32x64xbf16>, vector<8x64xf32> -> vector<8x64xf32>
    %11 = vector.extract_strided_slice %10 {offsets = [0, 0], sizes = [8, 32], strides = [1, 1]} : vector<8x64xf32> to vector<8x32xf32>
    %c0_7 = arith.constant 0 : index
    %c0_8 = arith.constant 0 : index
    %12 = vector.load %arg6[%c0_7, %c0_8] : memref<1x32xf32, #tpu.memory_space<vmem>>, vector<1x32xf32>
    %13 = vector.broadcast %12 : vector<1x32xf32> to vector<8x32xf32>
    %14 = arith.addf %11, %13 : vector<8x32xf32>
    %15 = vector.extract_strided_slice %10 {offsets = [0, 32], sizes = [8, 32], strides = [1, 1]} : vector<8x64xf32> to vector<8x32xf32>
    %c0_9 = arith.constant 0 : index
    %c0_10 = arith.constant 0 : index
    %16 = vector.load %arg4[%c0_9, %c0_10] : memref<32x32xbf16, #tpu.memory_space<vmem>>, vector<32x32xbf16>
    %cst_11 = arith.constant dense<0.000000e+00> : vector<8x32xf32>
    %17 = tpu.matmul %8, %16, %cst_11 {dimension_numbers = #tpu.dot_dimension_numbers<[1], [0], [0], [1], [0, 0, 1, 1], [], []>} : vector<8x32xbf16>, vector<32x32xbf16>, vector<8x32xf32> -> vector<8x32xf32>
    %c0_12 = arith.constant 0 : index
    %c0_13 = arith.constant 0 : index
    %18 = vector.load %arg7[%c0_12, %c0_13] : memref<1x32xf32, #tpu.memory_space<vmem>>, vector<1x32xf32>
    %19 = vector.broadcast %18 : vector<1x32xf32> to vector<8x32xf32>
    %20 = arith.addf %17, %19 : vector<8x32xf32>
    %21 = vector.extract_strided_slice %14 {offsets = [0, 0], sizes = [8, 8], strides = [1, 1]} : vector<8x32xf32> to vector<8x8xf32>
    %22 = vector.shape_cast %21 : vector<8x8xf32> to vector<1x8x8xf32>
    %23 = arith.truncf %22 : vector<1x8x8xf32> to vector<1x8x8xbf16>
    %24 = vector.extract_strided_slice %15 {offsets = [0, 0], sizes = [8, 8], strides = [1, 1]} : vector<8x32xf32> to vector<8x8xf32>
    %25 = vector.shape_cast %24 : vector<8x8xf32> to vector<1x8x8xf32>
    %26 = arith.truncf %25 : vector<1x8x8xf32> to vector<1x8x8xbf16>
    %27 = vector.extract_strided_slice %20 {offsets = [0, 0], sizes = [8, 8], strides = [1, 1]} : vector<8x32xf32> to vector<8x8xf32>
    %28 = vector.shape_cast %27 : vector<8x8xf32> to vector<1x8x8xf32>
    %29 = arith.truncf %28 : vector<1x8x8xf32> to vector<1x8x8xbf16>
    "tpu.trace_start"() <{level = 10 : i32, message = "btd,bsd->bts"}> : () -> ()
    %cst_14 = arith.constant dense<0.000000e+00> : vector<1x8x8xf32>
    %30 = tpu.matmul %23, %26, %cst_14 {dimension_numbers = #tpu.dot_dimension_numbers<[2], [2], [1], [1], [0, 0, 0, 1, 1, 1], [0], [0]>} : vector<1x8x8xbf16>, vector<1x8x8xbf16>, vector<1x8x8xf32> -> vector<1x8x8xf32>
    "tpu.trace_stop"() : () -> ()
    %cst_15 = arith.constant dense<0xFF800000> : vector<1x8xf32>
    %31 = vector.multi_reduction <maximumf>, %30, %cst_15 [2] : vector<1x8x8xf32> to vector<1x8xf32>
    %32 = vector.shape_cast %31 : vector<1x8xf32> to vector<1x8x1xf32>
    %33 = vector.broadcast %32 : vector<1x8x1xf32> to vector<1x8x8xf32>
    %34 = arith.subf %30, %33 : vector<1x8x8xf32>
    %35 = math.exp %34 : vector<1x8x8xf32>
    %cst_16 = arith.constant dense<0.000000e+00> : vector<1x8xf32>
    %36 = vector.multi_reduction <add>, %35, %cst_16 [2] : vector<1x8x8xf32> to vector<1x8xf32>
    %37 = vector.shape_cast %36 : vector<1x8xf32> to vector<1x8x1xf32>
    %38 = tpu.reciprocal %37 {approx = true} : vector<1x8x1xf32> -> vector<1x8x1xf32>
    %39 = vector.broadcast %38 : vector<1x8x1xf32> to vector<1x8x8xf32>
    %40 = arith.mulf %35, %39 : vector<1x8x8xf32>
    %41 = arith.truncf %40 : vector<1x8x8xf32> to vector<1x8x8xbf16>
    "tpu.trace_start"() <{level = 10 : i32, message = "bts,bsd->btd"}> : () -> ()
    %cst_17 = arith.constant dense<0.000000e+00> : vector<1x8x8xf32>
    %42 = tpu.matmul %41, %29, %cst_17 {dimension_numbers = #tpu.dot_dimension_numbers<[2], [1], [1], [2], [0, 0, 0, 1, 1, 2], [0], [0]>} : vector<1x8x8xbf16>, vector<1x8x8xbf16>, vector<1x8x8xf32> -> vector<1x8x8xf32>
    "tpu.trace_stop"() : () -> ()
    %43 = vector.shape_cast %42 : vector<1x8x8xf32> to vector<8x8xf32>
    %44 = arith.truncf %43 : vector<8x8xf32> to vector<8x8xbf16>
    %c0_18 = arith.constant 0 : index
    %c0_19 = arith.constant 0 : index
    %45 = vector.load %arg18[%c0_18, %c0_19] : memref<8x32xbf16, #tpu.memory_space<vmem>>, vector<8x8xbf16>
    tpu.vector_store %arg18[%c0_18, %c0_19], %44 {strides = array<i32>} : memref<8x32xbf16, #tpu.memory_space<vmem>>, vector<8x8xbf16>,
    %46 = vector.extract_strided_slice %14 {offsets = [0, 8], sizes = [8, 8], strides = [1, 1]} : vector<8x32xf32> to vector<8x8xf32>
    %47 = vector.shape_cast %46 : vector<8x8xf32> to vector<1x8x8xf32>
    %48 = arith.truncf %47 : vector<1x8x8xf32> to vector<1x8x8xbf16>
    %49 = vector.extract_strided_slice %15 {offsets = [0, 8], sizes = [8, 8], strides = [1, 1]} : vector<8x32xf32> to vector<8x8xf32>
    %50 = vector.shape_cast %49 : vector<8x8xf32> to vector<1x8x8xf32>
    %51 = arith.truncf %50 : vector<1x8x8xf32> to vector<1x8x8xbf16>
    %52 = vector.extract_strided_slice %20 {offsets = [0, 8], sizes = [8, 8], strides = [1, 1]} : vector<8x32xf32> to vector<8x8xf32>
    %53 = vector.shape_cast %52 : vector<8x8xf32> to vector<1x8x8xf32>
    %54 = arith.truncf %53 : vector<1x8x8xf32> to vector<1x8x8xbf16>
    "tpu.trace_start"() <{level = 10 : i32, message = "btd,bsd->bts"}> : () -> ()
    %cst_20 = arith.constant dense<0.000000e+00> : vector<1x8x8xf32>
    %55 = tpu.matmul %48, %51, %cst_20 {dimension_numbers = #tpu.dot_dimension_numbers<[2], [2], [1], [1], [0, 0, 0, 1, 1, 1], [0], [0]>} : vector<1x8x8xbf16>, vector<1x8x8xbf16>, vector<1x8x8xf32> -> vector<1x8x8xf32>
    "tpu.trace_stop"() : () -> ()
    %cst_21 = arith.constant dense<0xFF800000> : vector<1x8xf32>
    %56 = vector.multi_reduction <maximumf>, %55, %cst_21 [2] : vector<1x8x8xf32> to vector<1x8xf32>
    %57 = vector.shape_cast %56 : vector<1x8xf32> to vector<1x8x1xf32>
    %58 = vector.broadcast %57 : vector<1x8x1xf32> to vector<1x8x8xf32>
    %59 = arith.subf %55, %58 : vector<1x8x8xf32>
    %60 = math.exp %59 : vector<1x8x8xf32>
    %cst_22 = arith.constant dense<0.000000e+00> : vector<1x8xf32>
    %61 = vector.multi_reduction <add>, %60, %cst_22 [2] : vector<1x8x8xf32> to vector<1x8xf32>
    %62 = vector.shape_cast %61 : vector<1x8xf32> to vector<1x8x1xf32>
    %63 = tpu.reciprocal %62 {approx = true} : vector<1x8x1xf32> -> vector<1x8x1xf32>
    %64 = vector.broadcast %63 : vector<1x8x1xf32> to vector<1x8x8xf32>
    %65 = arith.mulf %60, %64 : vector<1x8x8xf32>
    %66 = arith.truncf %65 : vector<1x8x8xf32> to vector<1x8x8xbf16>
    "tpu.trace_start"() <{level = 10 : i32, message = "bts,bsd->btd"}> : () -> ()
    %cst_23 = arith.constant dense<0.000000e+00> : vector<1x8x8xf32>
    %67 = tpu.matmul %66, %54, %cst_23 {dimension_numbers = #tpu.dot_dimension_numbers<[2], [1], [1], [2], [0, 0, 0, 1, 1, 2], [0], [0]>} : vector<1x8x8xbf16>, vector<1x8x8xbf16>, vector<1x8x8xf32> -> vector<1x8x8xf32>
    "tpu.trace_stop"() : () -> ()
    %68 = vector.shape_cast %67 : vector<1x8x8xf32> to vector<8x8xf32>
    %69 = arith.truncf %68 : vector<8x8xf32> to vector<8x8xbf16>
    %c0_24 = arith.constant 0 : index
    %c8 = arith.constant 8 : index
    %70 = vector.load %arg18[%c0_24, %c8] : memref<8x32xbf16, #tpu.memory_space<vmem>>, vector<8x8xbf16>
    tpu.vector_store %arg18[%c0_24, %c8], %69 {strides = array<i32>} : memref<8x32xbf16, #tpu.memory_space<vmem>>, vector<8x8xbf16>,
    %71 = vector.extract_strided_slice %14 {offsets = [0, 16], sizes = [8, 8], strides = [1, 1]} : vector<8x32xf32> to vector<8x8xf32>
    %72 = vector.shape_cast %71 : vector<8x8xf32> to vector<1x8x8xf32>
    %73 = arith.truncf %72 : vector<1x8x8xf32> to vector<1x8x8xbf16>
    %74 = vector.extract_strided_slice %15 {offsets = [0, 16], sizes = [8, 8], strides = [1, 1]} : vector<8x32xf32> to vector<8x8xf32>
    %75 = vector.shape_cast %74 : vector<8x8xf32> to vector<1x8x8xf32>
    %76 = arith.truncf %75 : vector<1x8x8xf32> to vector<1x8x8xbf16>
    %77 = vector.extract_strided_slice %20 {offsets = [0, 16], sizes = [8, 8], strides = [1, 1]} : vector<8x32xf32> to vector<8x8xf32>
    %78 = vector.shape_cast %77 : vector<8x8xf32> to vector<1x8x8xf32>
    %79 = arith.truncf %78 : vector<1x8x8xf32> to vector<1x8x8xbf16>
    "tpu.trace_start"() <{level = 10 : i32, message = "btd,bsd->bts"}> : () -> ()
    %cst_25 = arith.constant dense<0.000000e+00> : vector<1x8x8xf32>
    %80 = tpu.matmul %73, %76, %cst_25 {dimension_numbers = #tpu.dot_dimension_numbers<[2], [2], [1], [1], [0, 0, 0, 1, 1, 1], [0], [0]>} : vector<1x8x8xbf16>, vector<1x8x8xbf16>, vector<1x8x8xf32> -> vector<1x8x8xf32>
    "tpu.trace_stop"() : () -> ()
    %cst_26 = arith.constant dense<0xFF800000> : vector<1x8xf32>
    %81 = vector.multi_reduction <maximumf>, %80, %cst_26 [2] : vector<1x8x8xf32> to vector<1x8xf32>
    %82 = vector.shape_cast %81 : vector<1x8xf32> to vector<1x8x1xf32>
    %83 = vector.broadcast %82 : vector<1x8x1xf32> to vector<1x8x8xf32>
    %84 = arith.subf %80, %83 : vector<1x8x8xf32>
    %85 = math.exp %84 : vector<1x8x8xf32>
    %cst_27 = arith.constant dense<0.000000e+00> : vector<1x8xf32>
    %86 = vector.multi_reduction <add>, %85, %cst_27 [2] : vector<1x8x8xf32> to vector<1x8xf32>
    %87 = vector.shape_cast %86 : vector<1x8xf32> to vector<1x8x1xf32>
    %88 = tpu.reciprocal %87 {approx = true} : vector<1x8x1xf32> -> vector<1x8x1xf32>
    %89 = vector.broadcast %88 : vector<1x8x1xf32> to vector<1x8x8xf32>
    %90 = arith.mulf %85, %89 : vector<1x8x8xf32>
    %91 = arith.truncf %90 : vector<1x8x8xf32> to vector<1x8x8xbf16>
    "tpu.trace_start"() <{level = 10 : i32, message = "bts,bsd->btd"}> : () -> ()
    %cst_28 = arith.constant dense<0.000000e+00> : vector<1x8x8xf32>
    %92 = tpu.matmul %91, %79, %cst_28 {dimension_numbers = #tpu.dot_dimension_numbers<[2], [1], [1], [2], [0, 0, 0, 1, 1, 2], [0], [0]>} : vector<1x8x8xbf16>, vector<1x8x8xbf16>, vector<1x8x8xf32> -> vector<1x8x8xf32>
    "tpu.trace_stop"() : () -> ()
    %93 = vector.shape_cast %92 : vector<1x8x8xf32> to vector<8x8xf32>
    %94 = arith.truncf %93 : vector<8x8xf32> to vector<8x8xbf16>
    %c0_29 = arith.constant 0 : index
    %c16 = arith.constant 16 : index
    %95 = vector.load %arg18[%c0_29, %c16] : memref<8x32xbf16, #tpu.memory_space<vmem>>, vector<8x8xbf16>
    tpu.vector_store %arg18[%c0_29, %c16], %94 {strides = array<i32>} : memref<8x32xbf16, #tpu.memory_space<vmem>>, vector<8x8xbf16>,
    %96 = vector.extract_strided_slice %14 {offsets = [0, 24], sizes = [8, 8], strides = [1, 1]} : vector<8x32xf32> to vector<8x8xf32>
    %97 = vector.shape_cast %96 : vector<8x8xf32> to vector<1x8x8xf32>
    %98 = arith.truncf %97 : vector<1x8x8xf32> to vector<1x8x8xbf16>
    %99 = vector.extract_strided_slice %15 {offsets = [0, 24], sizes = [8, 8], strides = [1, 1]} : vector<8x32xf32> to vector<8x8xf32>
    %100 = vector.shape_cast %99 : vector<8x8xf32> to vector<1x8x8xf32>
    %101 = arith.truncf %100 : vector<1x8x8xf32> to vector<1x8x8xbf16>
    %102 = vector.extract_strided_slice %20 {offsets = [0, 24], sizes = [8, 8], strides = [1, 1]} : vector<8x32xf32> to vector<8x8xf32>
    %103 = vector.shape_cast %102 : vector<8x8xf32> to vector<1x8x8xf32>
    %104 = arith.truncf %103 : vector<1x8x8xf32> to vector<1x8x8xbf16>
    "tpu.trace_start"() <{level = 10 : i32, message = "btd,bsd->bts"}> : () -> ()
    %cst_30 = arith.constant dense<0.000000e+00> : vector<1x8x8xf32>
    %105 = tpu.matmul %98, %101, %cst_30 {dimension_numbers = #tpu.dot_dimension_numbers<[2], [2], [1], [1], [0, 0, 0, 1, 1, 1], [0], [0]>} : vector<1x8x8xbf16>, vector<1x8x8xbf16>, vector<1x8x8xf32> -> vector<1x8x8xf32>
    "tpu.trace_stop"() : () -> ()
    %cst_31 = arith.constant dense<0xFF800000> : vector<1x8xf32>
    %106 = vector.multi_reduction <maximumf>, %105, %cst_31 [2] : vector<1x8x8xf32> to vector<1x8xf32>
    %107 = vector.shape_cast %106 : vector<1x8xf32> to vector<1x8x1xf32>
    %108 = vector.broadcast %107 : vector<1x8x1xf32> to vector<1x8x8xf32>
    %109 = arith.subf %105, %108 : vector<1x8x8xf32>
    %110 = math.exp %109 : vector<1x8x8xf32>
    %cst_32 = arith.constant dense<0.000000e+00> : vector<1x8xf32>
    %111 = vector.multi_reduction <add>, %110, %cst_32 [2] : vector<1x8x8xf32> to vector<1x8xf32>
    %112 = vector.shape_cast %111 : vector<1x8xf32> to vector<1x8x1xf32>
    %113 = tpu.reciprocal %112 {approx = true} : vector<1x8x1xf32> -> vector<1x8x1xf32>
    %114 = vector.broadcast %113 : vector<1x8x1xf32> to vector<1x8x8xf32>
    %115 = arith.mulf %110, %114 : vector<1x8x8xf32>
    %116 = arith.truncf %115 : vector<1x8x8xf32> to vector<1x8x8xbf16>
    "tpu.trace_start"() <{level = 10 : i32, message = "bts,bsd->btd"}> : () -> ()
    %cst_33 = arith.constant dense<0.000000e+00> : vector<1x8x8xf32>
    %117 = tpu.matmul %116, %104, %cst_33 {dimension_numbers = #tpu.dot_dimension_numbers<[2], [1], [1], [2], [0, 0, 0, 1, 1, 2], [0], [0]>} : vector<1x8x8xbf16>, vector<1x8x8xbf16>, vector<1x8x8xf32> -> vector<1x8x8xf32>
    "tpu.trace_stop"() : () -> ()
    %118 = vector.shape_cast %117 : vector<1x8x8xf32> to vector<8x8xf32>
    %119 = arith.truncf %118 : vector<8x8xf32> to vector<8x8xbf16>
    %c0_34 = arith.constant 0 : index
    %c24 = arith.constant 24 : index
    %120 = vector.load %arg18[%c0_34, %c24] : memref<8x32xbf16, #tpu.memory_space<vmem>>, vector<8x8xbf16>
    tpu.vector_store %arg18[%c0_34, %c24], %119 {strides = array<i32>} : memref<8x32xbf16, #tpu.memory_space<vmem>>, vector<8x8xbf16>,
    %c0_35 = arith.constant 0 : index
    %c0_36 = arith.constant 0 : index
    %121 = vector.load %arg18[%c0_35, %c0_36] : memref<8x32xbf16, #tpu.memory_space<vmem>>, vector<8x32xbf16>
    %c0_37 = arith.constant 0 : index
    %c0_38 = arith.constant 0 : index
    %122 = vector.load %arg5[%c0_37, %c0_38] : memref<32x32xbf16, #tpu.memory_space<vmem>>, vector<32x32xbf16>
    %cst_39 = arith.constant dense<0.000000e+00> : vector<8x32xf32>
    %123 = tpu.matmul %121, %122, %cst_39 {dimension_numbers = #tpu.dot_dimension_numbers<[1], [0], [0], [1], [0, 0, 1, 1], [], []>} : vector<8x32xbf16>, vector<32x32xbf16>, vector<8x32xf32> -> vector<8x32xf32>
    %c0_40 = arith.constant 0 : index
    %c0_41 = arith.constant 0 : index
    %124 = vector.load %arg8[%c0_40, %c0_41] : memref<1x32xf32, #tpu.memory_space<vmem>>, vector<1x32xf32>
    %125 = vector.broadcast %124 : vector<1x32xf32> to vector<8x32xf32>
    %126 = arith.addf %123, %125 : vector<8x32xf32>
    %127 = arith.addf %2, %126 : vector<8x32xf32>
    %c0_42 = arith.constant 0 : index
    %c0_43 = arith.constant 0 : index
    %128 = vector.load %arg13[%c0_42, %c0_43] : memref<1x32xf32, #tpu.memory_space<vmem>>, vector<1x32xf32>
    %c0_44 = arith.constant 0 : index
    %c0_45 = arith.constant 0 : index
    %129 = vector.load %arg14[%c0_44, %c0_45] : memref<1x32xf32, #tpu.memory_space<vmem>>, vector<1x32xf32>
    %cst_46 = arith.constant dense<0.000000e+00> : vector<8xf32>
    %130 = vector.multi_reduction <add>, %127, %cst_46 [1] : vector<8x32xf32> to vector<8xf32>
    %131 = vector.shape_cast %130 : vector<8xf32> to vector<8x1xf32>
    %cst_47 = arith.constant 3.200000e+01 : f32
    %132 = vector.broadcast %cst_47 : f32 to vector<8x1xf32>
    %133 = arith.divf %131, %132 : vector<8x1xf32>
    %134 = vector.broadcast %133 : vector<8x1xf32> to vector<8x32xf32>
    %135 = arith.subf %127, %134 : vector<8x32xf32>
    %136 = arith.mulf %135, %135 : vector<8x32xf32>
    %cst_48 = arith.constant dense<0.000000e+00> : vector<8xf32>
    %137 = vector.multi_reduction <add>, %136, %cst_48 [1] : vector<8x32xf32> to vector<8xf32>
    %138 = vector.shape_cast %137 : vector<8xf32> to vector<8x1xf32>
    %cst_49 = arith.constant 3.200000e+01 : f32
    %139 = vector.broadcast %cst_49 : f32 to vector<8x1xf32>
    %140 = arith.divf %138, %139 : vector<8x1xf32>
    %cst_50 = arith.constant 9.99999974E-6 : f32
    %141 = vector.broadcast %cst_50 : f32 to vector<8x1xf32>
    %142 = arith.addf %140, %141 : vector<8x1xf32>
    %143 = math.rsqrt %142 : vector<8x1xf32>
    %144 = vector.broadcast %143 : vector<8x1xf32> to vector<8x32xf32>
    %145 = arith.mulf %135, %144 : vector<8x32xf32>
    %146 = vector.broadcast %128 : vector<1x32xf32> to vector<8x32xf32>
    %147 = arith.mulf %145, %146 : vector<8x32xf32>
    %148 = vector.broadcast %129 : vector<1x32xf32> to vector<8x32xf32>
    %149 = arith.addf %147, %148 : vector<8x32xf32>
    %150 = arith.truncf %149 : vector<8x32xf32> to vector<8x32xbf16>
    %c0_51 = arith.constant 0 : index
    %c0_52 = arith.constant 0 : index
    %151 = vector.load %arg9[%c0_51, %c0_52] : memref<32x64xbf16, #tpu.memory_space<vmem>>, vector<32x64xbf16>
    %cst_53 = arith.constant dense<0.000000e+00> : vector<8x64xf32>
    %152 = tpu.matmul %150, %151, %cst_53 {dimension_numbers = #tpu.dot_dimension_numbers<[1], [0], [0], [1], [0, 0, 1, 1], [], []>} : vector<8x32xbf16>, vector<32x64xbf16>, vector<8x64xf32> -> vector<8x64xf32>
    %c0_54 = arith.constant 0 : index
    %c0_55 = arith.constant 0 : index
    %153 = vector.load %arg10[%c0_54, %c0_55] : memref<1x64xf32, #tpu.memory_space<vmem>>, vector<1x64xf32>
    %154 = vector.broadcast %153 : vector<1x64xf32> to vector<8x64xf32>
    %155 = arith.addf %152, %154 : vector<8x64xf32>
    %cst_56 = arith.constant 0.000000e+00 : f32
    %156 = vector.broadcast %cst_56 : f32 to vector<8x64xf32>
    %157 = arith.maximumf %155, %156 : vector<8x64xf32>
    %158 = arith.truncf %157 : vector<8x64xf32> to vector<8x64xbf16>
    %c0_57 = arith.constant 0 : index
    %c0_58 = arith.constant 0 : index
    %159 = vector.load %arg11[%c0_57, %c0_58] : memref<64x32xbf16, #tpu.memory_space<vmem>>, vector<64x32xbf16>
    %cst_59 = arith.constant dense<0.000000e+00> : vector<8x32xf32>
    %160 = tpu.matmul %158, %159, %cst_59 {dimension_numbers = #tpu.dot_dimension_numbers<[1], [0], [0], [1], [0, 0, 1, 1], [], []>} : vector<8x64xbf16>, vector<64x32xbf16>, vector<8x32xf32> -> vector<8x32xf32>
    %c0_60 = arith.constant 0 : index
    %c0_61 = arith.constant 0 : index
    %161 = vector.load %arg12[%c0_60, %c0_61] : memref<1x32xf32, #tpu.memory_space<vmem>>, vector<1x32xf32>
    %162 = vector.broadcast %161 : vector<1x32xf32> to vector<8x32xf32>
    %163 = arith.addf %160, %162 : vector<8x32xf32>
    %164 = arith.addf %149, %163 : vector<8x32xf32>
    %c0_62 = arith.constant 0 : index
    %c0_63 = arith.constant 0 : index
    %165 = vector.load %arg15[%c0_62, %c0_63] : memref<1x32xf32, #tpu.memory_space<vmem>>, vector<1x32xf32>
    %c0_64 = arith.constant 0 : index
    %c0_65 = arith.constant 0 : index
    %166 = vector.load %arg16[%c0_64, %c0_65] : memref<1x32xf32, #tpu.memory_space<vmem>>, vector<1x32xf32>
    %cst_66 = arith.constant dense<0.000000e+00> : vector<8xf32>
    %167 = vector.multi_reduction <add>, %164, %cst_66 [1] : vector<8x32xf32> to vector<8xf32>
    %168 = vector.shape_cast %167 : vector<8xf32> to vector<8x1xf32>
    %cst_67 = arith.constant 3.200000e+01 : f32
    %169 = vector.broadcast %cst_67 : f32 to vector<8x1xf32>
    %170 = arith.divf %168, %169 : vector<8x1xf32>
    %171 = vector.broadcast %170 : vector<8x1xf32> to vector<8x32xf32>
    %172 = arith.subf %164, %171 : vector<8x32xf32>
    %173 = arith.mulf %172, %172 : vector<8x32xf32>
    %cst_68 = arith.constant dense<0.000000e+00> : vector<8xf32>
    %174 = vector.multi_reduction <add>, %173, %cst_68 [1] : vector<8x32xf32> to vector<8xf32>
    %175 = vector.shape_cast %174 : vector<8xf32> to vector<8x1xf32>
    %cst_69 = arith.constant 3.200000e+01 : f32
    %176 = vector.broadcast %cst_69 : f32 to vector<8x1xf32>
    %177 = arith.divf %175, %176 : vector<8x1xf32>
    %cst_70 = arith.constant 9.99999974E-6 : f32
    %178 = vector.broadcast %cst_70 : f32 to vector<8x1xf32>
    %179 = arith.addf %177, %178 : vector<8x1xf32>
    %180 = math.rsqrt %179 : vector<8x1xf32>
    %181 = vector.broadcast %180 : vector<8x1xf32> to vector<8x32xf32>
    %182 = arith.mulf %172, %181 : vector<8x32xf32>
    %183 = vector.broadcast %165 : vector<1x32xf32> to vector<8x32xf32>
    %184 = arith.mulf %182, %183 : vector<8x32xf32>
    %185 = vector.broadcast %166 : vector<1x32xf32> to vector<8x32xf32>
    %186 = arith.addf %184, %185 : vector<8x32xf32>
    %187 = vector.shape_cast %186 : vector<8x32xf32> to vector<1x8x32xf32>
    %188 = arith.truncf %187 : vector<1x8x32xf32> to vector<1x8x32xbf16>
    %c0_71 = arith.constant 0 : index
    %c0_72 = arith.constant 0 : index
    %c0_73 = arith.constant 0 : index
    %189 = vector.load %arg17[%c0_71, %c0_72, %c0_73] : memref<1x8x32xbf16, #tpu.memory_space<vmem>>, vector<1x8x32xbf16>
    tpu.vector_store %arg17[%c0_71, %c0_72, %c0_73], %188 {strides = array<i32>} : memref<1x8x32xbf16, #tpu.memory_space<vmem>>, vector<1x8x32xbf16>,
    return
  }
  func.func @transform_0(%arg0: i32) -> (i32, i32, i32) {
    %c0_i32 = arith.constant 0 : i32
    %c0_i32_0 = arith.constant 0 : i32
    %c0_i32_1 = arith.constant 0 : i32
    return %arg0, %c0_i32, %c0_i32_0 : i32, i32, i32
  }
  func.func @transform_1(%arg0: i32) -> (i32, i32, i32) {
    %c0_i32 = arith.constant 0 : i32
    %c0_i32_0 = arith.constant 0 : i32
    %c0_i32_1 = arith.constant 0 : i32
    return %arg0, %c0_i32, %c0_i32_0 : i32, i32, i32
  }
  func.func @transform_2(%arg0: i32) -> (i32, i32) {
    %c0_i32 = arith.constant 0 : i32
    %c0_i32_0 = arith.constant 0 : i32
    %c0_i32_1 = arith.constant 0 : i32
    return %c0_i32, %c0_i32_0 : i32, i32
  }
  func.func @transform_3(%arg0: i32) -> (i32, i32) {
    %c0_i32 = arith.constant 0 : i32
    %c0_i32_0 = arith.constant 0 : i32
    %c0_i32_1 = arith.constant 0 : i32
    return %c0_i32, %c0_i32_0 : i32, i32
  }
  func.func @transform_4(%arg0: i32) -> (i32, i32) {
    %c0_i32 = arith.constant 0 : i32
    %c0_i32_0 = arith.constant 0 : i32
    %c0_i32_1 = arith.constant 0 : i32
    return %c0_i32, %c0_i32_0 : i32, i32
  }
  func.func @transform_5(%arg0: i32) -> (i32, i32) {
    %c0_i32 = arith.constant 0 : i32
    %c0_i32_0 = arith.constant 0 : i32
    %c0_i32_1 = arith.constant 0 : i32
    return %c0_i32, %c0_i32_0 : i32, i32
  }
  func.func @transform_6(%arg0: i32) -> (i32, i32) {
    %c0_i32 = arith.constant 0 : i32
    %c0_i32_0 = arith.constant 0 : i32
    %c0_i32_1 = arith.constant 0 : i32
    return %c0_i32, %c0_i32_0 : i32, i32
  }
  func.func @transform_7(%arg0: i32) -> (i32, i32) {
    %c0_i32 = arith.constant 0 : i32
    %c0_i32_0 = arith.constant 0 : i32
    %c0_i32_1 = arith.constant 0 : i32
    return %c0_i32, %c0_i32_0 : i32, i32
  }
  func.func @transform_8(%arg0: i32) -> (i32, i32) {
    %c0_i32 = arith.constant 0 : i32
    %c0_i32_0 = arith.constant 0 : i32
    %c0_i32_1 = arith.constant 0 : i32
    return %c0_i32, %c0_i32_0 : i32, i32
  }
  func.func @transform_9(%arg0: i32) -> (i32, i32) {
    %c0_i32 = arith.constant 0 : i32
    %c0_i32_0 = arith.constant 0 : i32
    %c0_i32_1 = arith.constant 0 : i32
    return %c0_i32, %c0_i32_0 : i32, i32
  }
  func.func @transform_10(%arg0: i32) -> (i32, i32) {
    %c0_i32 = arith.constant 0 : i32
    %c0_i32_0 = arith.constant 0 : i32
    %c0_i32_1 = arith.constant 0 : i32
    return %c0_i32, %c0_i32_0 : i32, i32
  }
  func.func @transform_11(%arg0: i32) -> (i32, i32) {
    %c0_i32 = arith.constant 0 : i32
    %c0_i32_0 = arith.constant 0 : i32
    %c0_i32_1 = arith.constant 0 : i32
    return %c0_i32, %c0_i32_0 : i32, i32
  }
  func.func @transform_12(%arg0: i32) -> (i32, i32) {
    %c0_i32 = arith.constant 0 : i32
    %c0_i32_0 = arith.constant 0 : i32
    %c0_i32_1 = arith.constant 0 : i32
    return %c0_i32, %c0_i32_0 : i32, i32
  }
  func.func @transform_13(%arg0: i32) -> (i32, i32) {
    %c0_i32 = arith.constant 0 : i32
    %c0_i32_0 = arith.constant 0 : i32
    %c0_i32_1 = arith.constant 0 : i32
    return %c0_i32, %c0_i32_0 : i32, i32
  }
  func.func @transform_14(%arg0: i32) -> (i32, i32) {
    %c0_i32 = arith.constant 0 : i32
    %c0_i32_0 = arith.constant 0 : i32
    %c0_i32_1 = arith.constant 0 : i32
    return %c0_i32, %c0_i32_0 : i32, i32
  }
  func.func @transform_15(%arg0: i32) -> (i32, i32) {
    %c0_i32 = arith.constant 0 : i32
    %c0_i32_0 = arith.constant 0 : i32
    %c0_i32_1 = arith.constant 0 : i32
    return %c0_i32, %c0_i32_0 : i32, i32
  }
  func.func @transform_16(%arg0: i32) -> (i32, i32, i32) {
    %c0_i32 = arith.constant 0 : i32
    %c0_i32_0 = arith.constant 0 : i32
    %c0_i32_1 = arith.constant 0 : i32
    return %arg0, %c0_i32, %c0_i32_0 : i32, i32, i32
  }
}

</mosaic_0001>

<llo_original>
// kernel: tpu_custom_call.1
$region0: #{tpu_custom_call.1}
  #allocation0 [shape = 'u32[]', space=smem, size = 0x4, offset = 0x4, fixed_abs, tag = 'smem constant byte address 0x4 - core index']
  #allocation1 [shape = 'u32[144,128]{1,0:T(1,128)}', space=vmem, size = 0x12000, scoped, tag = 'internal scratch']
  #allocation2 [shape = 'bf16[8,32]{1,0:T(8,128)(2,1)}', space=vmem, size = 0x800, scoped, tag = 'scratch operand']
  %s0 = inlined_call_operand.hbm [shape: bf16[2,8,32], index: 0, kind: input, shape index: {}]
  %s1 = inlined_call_operand.hbm [shape: bf16[2,8,32], index: 1, kind: input, shape index: {}]
  %s2 = inlined_call_operand.vmem [shape: bf16[32,64], index: 2, kind: input, shape index: {}]
  %s3 = inlined_call_operand.vmem [shape: bf16[32,32], index: 3, kind: input, shape index: {}]
  %s4 = inlined_call_operand.vmem [shape: bf16[32,32], index: 4, kind: input, shape index: {}]
  %s5 = inlined_call_operand.vmem [shape: f32[1,32], index: 5, kind: input, shape index: {}]
  %s6 = inlined_call_operand.vmem [shape: f32[1,32], index: 6, kind: input, shape index: {}]
  %s7 = inlined_call_operand.hbm [shape: f32[1,32], index: 7, kind: input, shape index: {}]
  %s8 = inlined_call_operand.hbm [shape: bf16[32,64], index: 8, kind: input, shape index: {}]
  %s9 = inlined_call_operand.hbm [shape: f32[1,64], index: 9, kind: input, shape index: {}]
  %s10 = inlined_call_operand.vmem [shape: bf16[64,32], index: 10, kind: input, shape index: {}]
  %s11 = inlined_call_operand.vmem [shape: f32[1,32], index: 11, kind: input, shape index: {}]
  %s12 = inlined_call_operand.vmem [shape: f32[1,32], index: 12, kind: input, shape index: {}]
  %s13 = inlined_call_operand.vmem [shape: f32[1,32], index: 13, kind: input, shape index: {}]
  %s14 = inlined_call_operand.vmem [shape: f32[1,32], index: 14, kind: input, shape index: {}]
  %s15 = inlined_call_operand.vmem [shape: f32[1,32], index: 15, kind: input, shape index: {}]
  %s16 = inlined_call_operand.hbm [shape: bf16[2,8,32], index: 16, kind: output, shape index: {}]
  %s17 = sld [smem:[#allocation0]]
  $region117: #{tpu_custom_call.1} parent=0
    _
  %s19 = ssub.s32 1, %s17
  %s20 = scalar_select 0, %s19, %s17
  $region1: #{tpu_custom_call.1} parent=0
    #allocation3 [shape = 'u8[4096]{0}', space=vmem, size = 0x1000, scoped, tag = 'input window, operand 0']
    #allocation4 [shape = 's32[2]{0}', space=sflag, size = 0x8, scoped, tag = 'scoped memory for tpu_custom_call.1']
    #allocation5 [shape = 's32[2]{0}', space=sflag, size = 0x8, scoped, tag = 'scoped memory for tpu_custom_call.1']
    #allocation6 [shape = 'u8[4096]{0}', space=vmem, size = 0x1000, scoped, tag = 'input window, operand 1']
    #allocation7 [shape = 's32[2]{0}', space=sflag, size = 0x8, scoped, tag = 'scoped memory for tpu_custom_call.1']
    #allocation8 [shape = 'u8[512]{0}', space=vmem, size = 0x400, scoped, tag = 'input window, operand 7, single buffered']
    #allocation9 [shape = 'u8[8192]{0}', space=vmem, size = 0x2000, scoped, tag = 'input window, operand 8, single buffered']
    #allocation10 [shape = 's32[1]{0}', space=sflag, size = 0x4, scoped, tag = 'scoped memory for tpu_custom_call.1']
    #allocation11 [shape = 'u8[512]{0}', space=vmem, size = 0x400, scoped, tag = 'input window, operand 9, single buffered']
    #allocation12 [shape = 'u8[4096]{0}', space=vmem, size = 0x1000, scoped, tag = 'output window, operand 0']
    %21 = vsyncpa [#allocation4], 0
    %s22 = scalar_lea.sflag [#allocation4], 1
    %23 = vsyncpa %s22, 0
    %24 = vsyncpa [#allocation7], 0
    %s25 = scalar_lea.sflag [#allocation7], 1
    %26 = vsyncpa %s25, 0
    %27 = vsyncpa [#allocation10], 0
    %28 = vsyncpa [#allocation5], 0
    %s29 = scalar_lea.sflag [#allocation5], 1
    %30 = vsyncpa %s29, 0
    loop: start=0, step=1, limit=4
    $region2: #{tpu_custom_call.1} parent=1 // loop_pre_header
      _
    $region3: #{tpu_custom_call.1} parent=1 // loop_header
      %s32 = sphi 0, %s36
      %p33 = scmp.ge.s32.totalorder %s32, 4
      %s42 = sphi 0, %s44
      %s45 = sphi 0, %s42
      %s46 = sphi 0, %s45
      %s62 = sphi 0, %s46
      %s68 = sphi 0, %s70
      %s71 = sphi 0, %s68
      %s72 = sphi 0, %s71
      %s88 = sphi 0, %s72
      %s92 = sphi 0, %s92
      %s94 = sphi 0, %s92
      %s95 = sphi 0, %s94
      %s109 = sphi 0, %s95
      %s113 = sphi 0, %s113
      %s115 = sphi 0, %s113
      %s116 = sphi 0, %s115
      %s130 = sphi 0, %s116
      %s134 = sphi 0, %s134
      %s136 = sphi 0, %s134
      %s137 = sphi 0, %s136
      %s151 = sphi 0, %s137
      %s155 = sphi 0, %s155
      %s157 = sphi 0, %s155
      %s158 = sphi 0, %s157
      %s172 = sphi 0, %s158
      %s176 = sphi 0, %s176
      %s178 = sphi 0, %s176
      %s179 = sphi 0, %s178
      %s193 = sphi 0, %s179
      %s197 = sphi 0, %s197
      %s199 = sphi 0, %s197
      %s200 = sphi 0, %s199
      %s214 = sphi 0, %s200
      %s218 = sphi 0, %s218
      %s220 = sphi 0, %s218
      %s221 = sphi 0, %s220
      %s235 = sphi 0, %s221
      %s239 = sphi 0, %s239
      %s241 = sphi 0, %s239
      %s242 = sphi 0, %s241
      %s256 = sphi 0, %s242
      %s260 = sphi 0, %s260
      %s262 = sphi 0, %s260
      %s263 = sphi 0, %s262
      %s277 = sphi 0, %s263
      %s281 = sphi 0, %s281
      %s283 = sphi 0, %s281
      %s284 = sphi 0, %s283
      %s298 = sphi 0, %s284
      %s302 = sphi 0, %s302
      %s304 = sphi 0, %s302
      %s305 = sphi 0, %s304
      %s319 = sphi 0, %s305
      %s323 = sphi 0, %s323
      %s325 = sphi 0, %s323
      %s326 = sphi 0, %s325
      %s340 = sphi 0, %s326
      %s344 = sphi 0, %s344
      %s346 = sphi 0, %s344
      %s347 = sphi 0, %s346
      %s361 = sphi 0, %s347
      %s365 = sphi 0, %s365
      %s367 = sphi 0, %s365
      %s368 = sphi 0, %s367
      %s382 = sphi 0, %s368
      %s388 = sphi 0, %s390
      %s391 = sphi 0, %s388
      %s392 = sphi 0, %s391
      %s408 = sphi 0, %s392
    $region4: #{tpu_custom_call.1} parent=1 // loop_header_branch
      %35 = sbr.rel (%p33) target = $region8
    $region5: #{tpu_custom_call.1} parent=1 // loop_body
      %s37 = ssub.s32 %s32, 1
      %s38 = ssub.s32 %s32, 2
      %s39 = sadd.s32 %s32, 1
      %s40 = ssub.s32 %s32, %s39
      %p41 = scmp.eq.s32.totalorder %s40, 0
      %s43 = sadd.s32 %s42, 1
      %s44 = scalar_select %p41, %s42, %s43
      %p47 = pneg %p41
      %p48 = scmp.eq.s32.totalorder %s32, 1
      %p49 = por %p47, %p48
      %p50 = scmp.ne.s32.totalorder %s42, %s45
      %p51 = scmp.eq.s32.totalorder %s32, 0
      %p52 = por %p50, %p51
      %p53 = scmp.ne.s32.totalorder %s42, %s45
      %p54 = scmp.eq.s32.totalorder %s37, 1
      %p55 = por %p53, %p54
      %p56 = scmp.ne.s32.totalorder %s45, %s46
      %p57 = scmp.eq.s32.totalorder %s37, 0
      %p58 = por %p56, %p57
      %p59 = scmp.ne.s32.totalorder %s45, %s46
      %p60 = scmp.eq.s32.totalorder %s38, 1
      %p61 = por %p59, %p60
      %p63 = scmp.ne.s32.totalorder %s46, %s62
      %p64 = scmp.eq.s32.totalorder %s38, 0
      %p65 = por %p63, %p64
      %s66 = ssub.s32 %s32, %s39
      %p67 = scmp.eq.s32.totalorder %s66, 0
      %s69 = sadd.s32 %s68, 1
      %s70 = scalar_select %p67, %s68, %s69
      %p73 = pneg %p67
      %p74 = scmp.eq.s32.totalorder %s32, 1
      %p75 = por %p73, %p74
      %p76 = scmp.ne.s32.totalorder %s68, %s71
      %p77 = scmp.eq.s32.totalorder %s32, 0
      %p78 = por %p76, %p77
      %p79 = scmp.ne.s32.totalorder %s68, %s71
      %p80 = scmp.eq.s32.totalorder %s37, 1
      %p81 = por %p79, %p80
      %p82 = scmp.ne.s32.totalorder %s71, %s72
      %p83 = scmp.eq.s32.totalorder %s37, 0
      %p84 = por %p82, %p83
      %p85 = scmp.ne.s32.totalorder %s71, %s72
      %p86 = scmp.eq.s32.totalorder %s38, 1
      %p87 = por %p85, %p86
      %p89 = scmp.ne.s32.totalorder %s72, %s88
      %p90 = scmp.eq.s32.totalorder %s38, 0
      %p91 = por %p89, %p90
      %s93 = sadd.s32 %s92, 1
      %p96 = scmp.eq.s32.totalorder %s32, 1
      %p97 = scmp.ne.s32.totalorder %s92, %s94
      %p98 = scmp.eq.s32.totalorder %s32, 0
      %p99 = por %p97, %p98
      %p100 = scmp.ne.s32.totalorder %s92, %s94
      %p101 = scmp.eq.s32.totalorder %s37, 1
      %p102 = por %p100, %p101
      %p103 = scmp.ne.s32.totalorder %s94, %s95
      %p104 = scmp.eq.s32.totalorder %s37, 0
      %p105 = por %p103, %p104
      %p106 = scmp.ne.s32.totalorder %s94, %s95
      %p107 = scmp.eq.s32.totalorder %s38, 1
      %p108 = por %p106, %p107
      %p110 = scmp.ne.s32.totalorder %s95, %s109
      %p111 = scmp.eq.s32.totalorder %s38, 0
      %p112 = por %p110, %p111
      %s114 = sadd.s32 %s113, 1
      %p117 = scmp.eq.s32.totalorder %s32, 1
      %p118 = scmp.ne.s32.totalorder %s113, %s115
      %p119 = scmp.eq.s32.totalorder %s32, 0
      %p120 = por %p118, %p119
      %p121 = scmp.ne.s32.totalorder %s113, %s115
      %p122 = scmp.eq.s32.totalorder %s37, 1
      %p123 = por %p121, %p122
      %p124 = scmp.ne.s32.totalorder %s115, %s116
      %p125 = scmp.eq.s32.totalorder %s37, 0
      %p126 = por %p124, %p125
      %p127 = scmp.ne.s32.totalorder %s115, %s116
      %p128 = scmp.eq.s32.totalorder %s38, 1
      %p129 = por %p127, %p128
      %p131 = scmp.ne.s32.totalorder %s116, %s130
      %p132 = scmp.eq.s32.totalorder %s38, 0
      %p133 = por %p131, %p132
      %s135 = sadd.s32 %s134, 1
      %p138 = scmp.eq.s32.totalorder %s32, 1
      %p139 = scmp.ne.s32.totalorder %s134, %s136
      %p140 = scmp.eq.s32.totalorder %s32, 0
      %p141 = por %p139, %p140
      %p142 = scmp.ne.s32.totalorder %s134, %s136
      %p143 = scmp.eq.s32.totalorder %s37, 1
      %p144 = por %p142, %p143
      %p145 = scmp.ne.s32.totalorder %s136, %s137
      %p146 = scmp.eq.s32.totalorder %s37, 0
      %p147 = por %p145, %p146
      %p148 = scmp.ne.s32.totalorder %s136, %s137
      %p149 = scmp.eq.s32.totalorder %s38, 1
      %p150 = por %p148, %p149
      %p152 = scmp.ne.s32.totalorder %s137, %s151
      %p153 = scmp.eq.s32.totalorder %s38, 0
      %p154 = por %p152, %p153
      %s156 = sadd.s32 %s155, 1
      %p159 = scmp.eq.s32.totalorder %s32, 1
      %p160 = scmp.ne.s32.totalorder %s155, %s157
      %p161 = scmp.eq.s32.totalorder %s32, 0
      %p162 = por %p160, %p161
      %p163 = scmp.ne.s32.totalorder %s155, %s157
      %p164 = scmp.eq.s32.totalorder %s37, 1
      %p165 = por %p163, %p164
      %p166 = scmp.ne.s32.totalorder %s157, %s158
      %p167 = scmp.eq.s32.totalorder %s37, 0
      %p168 = por %p166, %p167
      %p169 = scmp.ne.s32.totalorder %s157, %s158
      %p170 = scmp.eq.s32.totalorder %s38, 1
      %p171 = por %p169, %p170
      %p173 = scmp.ne.s32.totalorder %s158, %s172
      %p174 = scmp.eq.s32.totalorder %s38, 0
      %p175 = por %p173, %p174
      %s177 = sadd.s32 %s176, 1
      %p180 = scmp.eq.s32.totalorder %s32, 1
      %p181 = scmp.ne.s32.totalorder %s176, %s178
      %p182 = scmp.eq.s32.totalorder %s32, 0
      %p183 = por %p181, %p182
      %p184 = scmp.ne.s32.totalorder %s176, %s178
      %p185 = scmp.eq.s32.totalorder %s37, 1
      %p186 = por %p184, %p185
      %p187 = scmp.ne.s32.totalorder %s178, %s179
      %p188 = scmp.eq.s32.totalorder %s37, 0
      %p189 = por %p187, %p188
      %p190 = scmp.ne.s32.totalorder %s178, %s179
      %p191 = scmp.eq.s32.totalorder %s38, 1
      %p192 = por %p190, %p191
      %p194 = scmp.ne.s32.totalorder %s179, %s193
      %p195 = scmp.eq.s32.totalorder %s38, 0
      %p196 = por %p194, %p195
      %s198 = sadd.s32 %s197, 1
      %p201 = scmp.eq.s32.totalorder %s32, 1
      %p202 = scmp.ne.s32.totalorder %s197, %s199
      %p203 = scmp.eq.s32.totalorder %s32, 0
      %p204 = por %p202, %p203
      %p205 = scmp.ne.s32.totalorder %s197, %s199
      %p206 = scmp.eq.s32.totalorder %s37, 1
      %p207 = por %p205, %p206
      %p208 = scmp.ne.s32.totalorder %s199, %s200
      %p209 = scmp.eq.s32.totalorder %s37, 0
      %p210 = por %p208, %p209
      %p211 = scmp.ne.s32.totalorder %s199, %s200
      %p212 = scmp.eq.s32.totalorder %s38, 1
      %p213 = por %p211, %p212
      %p215 = scmp.ne.s32.totalorder %s200, %s214
      %p216 = scmp.eq.s32.totalorder %s38, 0
      %p217 = por %p215, %p216
      %s219 = sadd.s32 %s218, 1
      %p222 = scmp.eq.s32.totalorder %s32, 1
      %p223 = scmp.ne.s32.totalorder %s218, %s220
      %p224 = scmp.eq.s32.totalorder %s32, 0
      %p225 = por %p223, %p224
      %p226 = scmp.ne.s32.totalorder %s218, %s220
      %p227 = scmp.eq.s32.totalorder %s37, 1
      %p228 = por %p226, %p227
      %p229 = scmp.ne.s32.totalorder %s220, %s221
      %p230 = scmp.eq.s32.totalorder %s37, 0
      %p231 = por %p229, %p230
      %p232 = scmp.ne.s32.totalorder %s220, %s221
      %p233 = scmp.eq.s32.totalorder %s38, 1
      %p234 = por %p232, %p233
      %p236 = scmp.ne.s32.totalorder %s221, %s235
      %p237 = scmp.eq.s32.totalorder %s38, 0
      %p238 = por %p236, %p237
      %s240 = sadd.s32 %s239, 1
      %p243 = scmp.eq.s32.totalorder %s32, 1
      %p244 = scmp.ne.s32.totalorder %s239, %s241
      %p245 = scmp.eq.s32.totalorder %s32, 0
      %p246 = por %p244, %p245
      %p247 = scmp.ne.s32.totalorder %s239, %s241
      %p248 = scmp.eq.s32.totalorder %s37, 1
      %p249 = por %p247, %p248
      %p250 = scmp.ne.s32.totalorder %s241, %s242
      %p251 = scmp.eq.s32.totalorder %s37, 0
      %p252 = por %p250, %p251
      %p253 = scmp.ne.s32.totalorder %s241, %s242
      %p254 = scmp.eq.s32.totalorder %s38, 1
      %p255 = por %p253, %p254
      %p257 = scmp.ne.s32.totalorder %s242, %s256
      %p258 = scmp.eq.s32.totalorder %s38, 0
      %p259 = por %p257, %p258
      %s261 = sadd.s32 %s260, 1
      %p264 = scmp.eq.s32.totalorder %s32, 1
      %p265 = scmp.ne.s32.totalorder %s260, %s262
      %p266 = scmp.eq.s32.totalorder %s32, 0
      %p267 = por %p265, %p266
      %p268 = scmp.ne.s32.totalorder %s260, %s262
      %p269 = scmp.eq.s32.totalorder %s37, 1
      %p270 = por %p268, %p269
      %p271 = scmp.ne.s32.totalorder %s262, %s263
      %p272 = scmp.eq.s32.totalorder %s37, 0
      %p273 = por %p271, %p272
      %p274 = scmp.ne.s32.totalorder %s262, %s263
      %p275 = scmp.eq.s32.totalorder %s38, 1
      %p276 = por %p274, %p275
      %p278 = scmp.ne.s32.totalorder %s263, %s277
      %p279 = scmp.eq.s32.totalorder %s38, 0
      %p280 = por %p278, %p279
      %s282 = sadd.s32 %s281, 1
      %p285 = scmp.eq.s32.totalorder %s32, 1
      %p286 = scmp.ne.s32.totalorder %s281, %s283
      %p287 = scmp.eq.s32.totalorder %s32, 0
      %p288 = por %p286, %p287
      %p289 = scmp.ne.s32.totalorder %s281, %s283
      %p290 = scmp.eq.s32.totalorder %s37, 1
      %p291 = por %p289, %p290
      %p292 = scmp.ne.s32.totalorder %s283, %s284
      %p293 = scmp.eq.s32.totalorder %s37, 0
      %p294 = por %p292, %p293
      %p295 = scmp.ne.s32.totalorder %s283, %s284
      %p296 = scmp.eq.s32.totalorder %s38, 1
      %p297 = por %p295, %p296
      %p299 = scmp.ne.s32.totalorder %s284, %s298
      %p300 = scmp.eq.s32.totalorder %s38, 0
      %p301 = por %p299, %p300
      %s303 = sadd.s32 %s302, 1
      %p306 = scmp.eq.s32.totalorder %s32, 1
      %p307 = scmp.ne.s32.totalorder %s302, %s304
      %p308 = scmp.eq.s32.totalorder %s32, 0
      %p309 = por %p307, %p308
      %p310 = scmp.ne.s32.totalorder %s302, %s304
      %p311 = scmp.eq.s32.totalorder %s37, 1
      %p312 = por %p310, %p311
      %p313 = scmp.ne.s32.totalorder %s304, %s305
      %p314 = scmp.eq.s32.totalorder %s37, 0
      %p315 = por %p313, %p314
      %p316 = scmp.ne.s32.totalorder %s304, %s305
      %p317 = scmp.eq.s32.totalorder %s38, 1
      %p318 = por %p316, %p317
      %p320 = scmp.ne.s32.totalorder %s305, %s319
      %p321 = scmp.eq.s32.totalorder %s38, 0
      %p322 = por %p320, %p321
      %s324 = sadd.s32 %s323, 1
      %p327 = scmp.eq.s32.totalorder %s32, 1
      %p328 = scmp.ne.s32.totalorder %s323, %s325
      %p329 = scmp.eq.s32.totalorder %s32, 0
      %p330 = por %p328, %p329
      %p331 = scmp.ne.s32.totalorder %s323, %s325
      %p332 = scmp.eq.s32.totalorder %s37, 1
      %p333 = por %p331, %p332
      %p334 = scmp.ne.s32.totalorder %s325, %s326
      %p335 = scmp.eq.s32.totalorder %s37, 0
      %p336 = por %p334, %p335
      %p337 = scmp.ne.s32.totalorder %s325, %s326
      %p338 = scmp.eq.s32.totalorder %s38, 1
      %p339 = por %p337, %p338
      %p341 = scmp.ne.s32.totalorder %s326, %s340
      %p342 = scmp.eq.s32.totalorder %s38, 0
      %p343 = por %p341, %p342
      %s345 = sadd.s32 %s344, 1
      %p348 = scmp.eq.s32.totalorder %s32, 1
      %p349 = scmp.ne.s32.totalorder %s344, %s346
      %p350 = scmp.eq.s32.totalorder %s32, 0
      %p351 = por %p349, %p350
      %p352 = scmp.ne.s32.totalorder %s344, %s346
      %p353 = scmp.eq.s32.totalorder %s37, 1
      %p354 = por %p352, %p353
      %p355 = scmp.ne.s32.totalorder %s346, %s347
      %p356 = scmp.eq.s32.totalorder %s37, 0
      %p357 = por %p355, %p356
      %p358 = scmp.ne.s32.totalorder %s346, %s347
      %p359 = scmp.eq.s32.totalorder %s38, 1
      %p360 = por %p358, %p359
      %p362 = scmp.ne.s32.totalorder %s347, %s361
      %p363 = scmp.eq.s32.totalorder %s38, 0
      %p364 = por %p362, %p363
      %s366 = sadd.s32 %s365, 1
      %p369 = scmp.eq.s32.totalorder %s32, 1
      %p370 = scmp.ne.s32.totalorder %s365, %s367
      %p371 = scmp.eq.s32.totalorder %s32, 0
      %p372 = por %p370, %p371
      %p373 = scmp.ne.s32.totalorder %s365, %s367
      %p374 = scmp.eq.s32.totalorder %s37, 1
      %p375 = por %p373, %p374
      %p376 = scmp.ne.s32.totalorder %s367, %s368
      %p377 = scmp.eq.s32.totalorder %s37, 0
      %p378 = por %p376, %p377
      %p379 = scmp.ne.s32.totalorder %s367, %s368
      %p380 = scmp.eq.s32.totalorder %s38, 1
      %p381 = por %p379, %p380
      %p383 = scmp.ne.s32.totalorder %s368, %s382
      %p384 = scmp.eq.s32.totalorder %s38, 0
      %p385 = por %p383, %p384
      %s386 = ssub.s32 %s32, %s39
      %p387 = scmp.eq.s32.totalorder %s386, 0
      %s389 = sadd.s32 %s388, 1
      %s390 = scalar_select %p387, %s388, %s389
      %p393 = pneg %p387
      %p394 = scmp.eq.s32.totalorder %s32, 1
      %p395 = por %p393, %p394
      %p396 = scmp.ne.s32.totalorder %s388, %s391
      %p397 = scmp.eq.s32.totalorder %s32, 0
      %p398 = por %p396, %p397
      %p399 = scmp.ne.s32.totalorder %s388, %s391
      %p400 = scmp.eq.s32.totalorder %s37, 1
      %p401 = por %p399, %p400
      %p402 = scmp.ne.s32.totalorder %s391, %s392
      %p403 = scmp.eq.s32.totalorder %s37, 0
      %p404 = por %p402, %p403
      %p405 = scmp.ne.s32.totalorder %s391, %s392
      %p406 = scmp.eq.s32.totalorder %s38, 1
      %p407 = por %p405, %p406
      %p409 = scmp.ne.s32.totalorder %s392, %s408
      %p410 = scmp.eq.s32.totalorder %s38, 0
      %p411 = por %p409, %p410
      %p412 = scmp.le.s32.totalorder 1, %s32
      %p413 = scmp.lt.s32.totalorder %s32, 3
      %p414 = pnand %p412, %p413
      %p415 = pneg %p414
      // Predicated region
      $region9: #{tpu_custom_call.1} parent=5 // pred_check
        _
      $region10: #{tpu_custom_call.1} parent=5 // pred_check_branch
        %417 = sbr.rel (%p414) target = $region12
      $region11: #{tpu_custom_call.1} parent=5 // pred_region
        %s418 = ssub.s32 %s32, 1
        // Predicated region
        $region13: #{tpu_custom_call.1} parent=11 // pred_check
          %p419 = pneg %p105
        $region14: #{tpu_custom_call.1} parent=11 // pred_check_branch
          %421 = sbr.rel (%p419) target = $region16
        $region15: #{tpu_custom_call.1} parent=11 // pred_region
          _
        $region16: #{tpu_custom_call.1} parent=11 // pred_fallthru
          _
        // Predicated region
        $region17: #{tpu_custom_call.1} parent=11 // pred_check
          %p422 = pneg %p126
        $region18: #{tpu_custom_call.1} parent=11 // pred_check_branch
          %424 = sbr.rel (%p422) target = $region20
        $region19: #{tpu_custom_call.1} parent=11 // pred_region
          _
        $region20: #{tpu_custom_call.1} parent=11 // pred_fallthru
          _
        // Predicated region
        $region21: #{tpu_custom_call.1} parent=11 // pred_check
          %p425 = pneg %p147
        $region22: #{tpu_custom_call.1} parent=11 // pred_check_branch
          %427 = sbr.rel (%p425) target = $region24
        $region23: #{tpu_custom_call.1} parent=11 // pred_region
          _
        $region24: #{tpu_custom_call.1} parent=11 // pred_fallthru
          _
        // Predicated region
        $region25: #{tpu_custom_call.1} parent=11 // pred_check
          %p428 = pneg %p168
        $region26: #{tpu_custom_call.1} parent=11 // pred_check_branch
          %430 = sbr.rel (%p428) target = $region28
        $region27: #{tpu_custom_call.1} parent=11 // pred_region
          _
        $region28: #{tpu_custom_call.1} parent=11 // pred_fallthru
          _
        // Predicated region
        $region29: #{tpu_custom_call.1} parent=11 // pred_check
          %p431 = pneg %p189
        $region30: #{tpu_custom_call.1} parent=11 // pred_check_branch
          %433 = sbr.rel (%p431) target = $region32
        $region31: #{tpu_custom_call.1} parent=11 // pred_region
          _
        $region32: #{tpu_custom_call.1} parent=11 // pred_fallthru
          _
        // Predicated region
        $region33: #{tpu_custom_call.1} parent=11 // pred_check
          %p434 = pneg %p210
        $region34: #{tpu_custom_call.1} parent=11 // pred_check_branch
          %436 = sbr.rel (%p434) target = $region36
        $region35: #{tpu_custom_call.1} parent=11 // pred_region
          %s438 = ssub.s32 16, 16
          %439 = vsyncadd [#allocation7], %s438
          %s441 = sshll.u32 [#allocation8], 4
          %s442 = int_to_ptr.vmem [resolvable:$true] %s441
          %444 = dma.hbm_to_vmem [thread:$0]  %s7, 16, %s442, [#allocation7]
        $region36: #{tpu_custom_call.1} parent=11 // pred_fallthru
          _
        // Predicated region
        $region37: #{tpu_custom_call.1} parent=11 // pred_check
          %p445 = pneg %p231
        $region38: #{tpu_custom_call.1} parent=11 // pred_check_branch
          %447 = sbr.rel (%p445) target = $region40
        $region39: #{tpu_custom_call.1} parent=11 // pred_region
          %s449 = ssub.s32 256, 256
          %450 = vsyncadd [#allocation10], %s449
          %s451 = sshll.u32 [#allocation9], 4
          %s452 = int_to_ptr.vmem [resolvable:$true] %s451
          %457 = dma.hbm_to_vmem [thread:$0]  %s8, 256, %s452, [#allocation10], 64, 64, 4
        $region40: #{tpu_custom_call.1} parent=11 // pred_fallthru
          _
        // Predicated region
        $region41: #{tpu_custom_call.1} parent=11 // pred_check
          %p458 = pneg %p252
        $region42: #{tpu_custom_call.1} parent=11 // pred_check_branch
          %460 = sbr.rel (%p458) target = $region44
        $region43: #{tpu_custom_call.1} parent=11 // pred_region
          %s462 = ssub.s32 16, 16
          %463 = vsyncadd [#allocation10], %s462
          %s465 = sshll.u32 [#allocation11], 4
          %s466 = int_to_ptr.vmem [resolvable:$true] %s465
          %468 = dma.hbm_to_vmem [thread:$0]  %s9, 16, %s466, [#allocation10]
        $region44: #{tpu_custom_call.1} parent=11 // pred_fallthru
          _
        // Predicated region
        $region45: #{tpu_custom_call.1} parent=11 // pred_check
          %p469 = pneg %p273
        $region46: #{tpu_custom_call.1} parent=11 // pred_check_branch
          %471 = sbr.rel (%p469) target = $region48
        $region47: #{tpu_custom_call.1} parent=11 // pred_region
          _
        $region48: #{tpu_custom_call.1} parent=11 // pred_fallthru
          _
        // Predicated region
        $region49: #{tpu_custom_call.1} parent=11 // pred_check
          %p472 = pneg %p294
        $region50: #{tpu_custom_call.1} parent=11 // pred_check_branch
          %474 = sbr.rel (%p472) target = $region52
        $region51: #{tpu_custom_call.1} parent=11 // pred_region
          _
        $region52: #{tpu_custom_call.1} parent=11 // pred_fallthru
          _
        // Predicated region
        $region53: #{tpu_custom_call.1} parent=11 // pred_check
          %p475 = pneg %p315
        $region54: #{tpu_custom_call.1} parent=11 // pred_check_branch
          %477 = sbr.rel (%p475) target = $region56
        $region55: #{tpu_custom_call.1} parent=11 // pred_region
          _
        $region56: #{tpu_custom_call.1} parent=11 // pred_fallthru
          _
        // Predicated region
        $region57: #{tpu_custom_call.1} parent=11 // pred_check
          %p478 = pneg %p336
        $region58: #{tpu_custom_call.1} parent=11 // pred_check_branch
          %480 = sbr.rel (%p478) target = $region60
        $region59: #{tpu_custom_call.1} parent=11 // pred_region
          _
        $region60: #{tpu_custom_call.1} parent=11 // pred_fallthru
          _
        // Predicated region
        $region61: #{tpu_custom_call.1} parent=11 // pred_check
          %p481 = pneg %p357
        $region62: #{tpu_custom_call.1} parent=11 // pred_check_branch
          %483 = sbr.rel (%p481) target = $region64
        $region63: #{tpu_custom_call.1} parent=11 // pred_region
          _
        $region64: #{tpu_custom_call.1} parent=11 // pred_fallthru
          _
        // Predicated region
        $region65: #{tpu_custom_call.1} parent=11 // pred_check
          %p484 = pneg %p378
        $region66: #{tpu_custom_call.1} parent=11 // pred_check_branch
          %486 = sbr.rel (%p484) target = $region68
        $region67: #{tpu_custom_call.1} parent=11 // pred_region
          _
        $region68: #{tpu_custom_call.1} parent=11 // pred_fallthru
          _
      $region12: #{tpu_custom_call.1} parent=5 // pred_fallthru
        _
      %p487 = scmp.lt.s32.totalorder %s32, 2
      // Predicated region
      $region69: #{tpu_custom_call.1} parent=5 // pred_check
        %p488 = pneg %p487
      $region70: #{tpu_custom_call.1} parent=5 // pred_check_branch
        %490 = sbr.rel (%p488) target = $region72
      $region71: #{tpu_custom_call.1} parent=5 // pred_region
        // Predicated region
        $region73: #{tpu_custom_call.1} parent=71 // pred_check
          %p491 = pneg %p52
        $region74: #{tpu_custom_call.1} parent=71 // pred_check_branch
          %493 = sbr.rel (%p491) target = $region76
        $region75: #{tpu_custom_call.1} parent=71 // pred_region
          %s494 = sand.u32 %s42, 1
          %s495 = scalar_lea.sflag [#allocation4], %s494
          %s496 = sand.u32 %s42, 1
          %s497 = smul.addr %s496, 4
          %s498 = scalar_lea.vmem [#allocation3], %s497
          %s500 = ssub.s32 64, 64
          %501 = vsyncadd %s495, %s500
          %s502 = smul.addr %s32, 64
          %s503 = scalar_lea.hbm %s0, %s502
          %s505 = sshll.u32 %s498, 4
          %s506 = int_to_ptr.vmem [resolvable:$true] %s505
          %508 = dma.hbm_to_vmem [thread:$0]  %s503, 64, %s506, %s495
        $region76: #{tpu_custom_call.1} parent=71 // pred_fallthru
          _
        // Predicated region
        $region77: #{tpu_custom_call.1} parent=71 // pred_check
          %p509 = pneg %p78
        $region78: #{tpu_custom_call.1} parent=71 // pred_check_branch
          %511 = sbr.rel (%p509) target = $region80
        $region79: #{tpu_custom_call.1} parent=71 // pred_region
          %s512 = sand.u32 %s32, 1
          %s513 = scalar_lea.sflag [#allocation7], %s512
          %s514 = sand.u32 %s68, 1
          %s515 = smul.addr %s514, 4
          %s516 = scalar_lea.vmem [#allocation6], %s515
          %s518 = ssub.s32 64, 64
          %519 = vsyncadd %s513, %s518
          %s520 = smul.addr %s32, 64
          %s521 = scalar_lea.hbm %s1, %s520
          %s523 = sshll.u32 %s516, 4
          %s524 = int_to_ptr.vmem [resolvable:$true] %s523
          %526 = dma.hbm_to_vmem [thread:$0]  %s521, 64, %s524, %s513
        $region80: #{tpu_custom_call.1} parent=71 // pred_fallthru
          _
      $region72: #{tpu_custom_call.1} parent=5 // pred_fallthru
        _
      %p527 = scmp.le.s32.totalorder 1, %s32
      %p528 = scmp.lt.s32.totalorder %s32, 3
      %p529 = pnand %p527, %p528
      %p530 = pneg %p529
      // Predicated region
      $region81: #{tpu_custom_call.1} parent=5 // pred_check
        _
      $region82: #{tpu_custom_call.1} parent=5 // pred_check_branch
        %532 = sbr.rel (%p529) target = $region84
      $region83: #{tpu_custom_call.1} parent=5 // pred_region
        %s533 = ssub.s32 %s32, 1
        %s534 = sand.u32 %s45, 1
        %s535 = scalar_lea.sflag [#allocation4], %s534
        %s536 = sand.u32 %s45, 1
        %s537 = smul.addr %s536, 4
        %s538 = scalar_lea.vmem [#allocation3], %s537
        // Predicated region
        $region85: #{tpu_custom_call.1} parent=83 // pred_check
          %p539 = pneg %p58
        $region86: #{tpu_custom_call.1} parent=83 // pred_check_branch
          %541 = sbr.rel (%p539) target = $region88
        $region87: #{tpu_custom_call.1} parent=83 // pred_region
          %542 = dma.done %s535, 64
        $region88: #{tpu_custom_call.1} parent=83 // pred_fallthru
          _
        %s543 = sand.u32 %s37, 1
        %s544 = scalar_lea.sflag [#allocation7], %s543
        %s545 = sand.u32 %s71, 1
        %s546 = smul.addr %s545, 4
        %s547 = scalar_lea.vmem [#allocation6], %s546
        // Predicated region
        $region89: #{tpu_custom_call.1} parent=83 // pred_check
          %p548 = pneg %p84
        $region90: #{tpu_custom_call.1} parent=83 // pred_check_branch
          %550 = sbr.rel (%p548) target = $region92
        $region91: #{tpu_custom_call.1} parent=83 // pred_region
          %551 = dma.done %s544, 64
        $region92: #{tpu_custom_call.1} parent=83 // pred_fallthru
          _
        // Predicated region
        $region93: #{tpu_custom_call.1} parent=83 // pred_check
          %p552 = pneg %p210
        $region94: #{tpu_custom_call.1} parent=83 // pred_check_branch
          %554 = sbr.rel (%p552) target = $region96
        $region95: #{tpu_custom_call.1} parent=83 // pred_region
          %555 = dma.done [#allocation7], 16
        $region96: #{tpu_custom_call.1} parent=83 // pred_fallthru
          _
        // Predicated region
        $region97: #{tpu_custom_call.1} parent=83 // pred_check
          %p556 = pneg %p231
        $region98: #{tpu_custom_call.1} parent=83 // pred_check_branch
          %558 = sbr.rel (%p556) target = $region100
        $region99: #{tpu_custom_call.1} parent=83 // pred_region
          %559 = dma.done [#allocation10], 256
        $region100: #{tpu_custom_call.1} parent=83 // pred_fallthru
          _
        // Predicated region
        $region101: #{tpu_custom_call.1} parent=83 // pred_check
          %p560 = pneg %p252
        $region102: #{tpu_custom_call.1} parent=83 // pred_check_branch
          %562 = sbr.rel (%p560) target = $region104
        $region103: #{tpu_custom_call.1} parent=83 // pred_region
          %563 = dma.done [#allocation10], 16
        $region104: #{tpu_custom_call.1} parent=83 // pred_fallthru
          _
        %s564 = sand.u32 %s45, 1
        %s565 = scalar_lea.sflag [#allocation4], %s564
        %s566 = sand.u32 %s45, 1
        %s567 = smul.addr %s566, 4
        %s568 = scalar_lea.vmem [#allocation3], %s567
        %p569 = pneg %p58
        %p570 = pneg %p55
        %s571 = sand.u32 %s37, 1
        %s572 = scalar_lea.sflag [#allocation7], %s571
        %s573 = sand.u32 %s71, 1
        %s574 = smul.addr %s573, 4
        %s575 = scalar_lea.vmem [#allocation6], %s574
        %p576 = pneg %p84
        %p577 = pneg %p81
        %p578 = pneg %p105
        %p579 = pneg %p102
        %p580 = pneg %p126
        %p581 = pneg %p123
        %p582 = pneg %p147
        %p583 = pneg %p144
        %p584 = pneg %p168
        %p585 = pneg %p165
        %p586 = pneg %p189
        %p587 = pneg %p186
        %p588 = pneg %p210
        %p589 = pneg %p207
        %p590 = pneg %p231
        %p591 = pneg %p228
        %p592 = pneg %p252
        %p593 = pneg %p249
        %p594 = pneg %p273
        %p595 = pneg %p270
        %p596 = pneg %p294
        %p597 = pneg %p291
        %p598 = pneg %p315
        %p599 = pneg %p312
        %p600 = pneg %p336
        %p601 = pneg %p333
        %p602 = pneg %p357
        %p603 = pneg %p354
        %p604 = pneg %p378
        %p605 = pneg %p375
        %p606 = pneg %p404
        %p607 = pneg %p401
        %s608 = sand.u32 %s391, 1
        %s609 = scalar_lea.sflag [#allocation5], %s608
        %s610 = sand.u32 %s391, 1
        %s611 = smul.addr %s610, 4
        %s612 = scalar_lea.vmem [#allocation12], %s611
        %v614 = vld [vmem:[%s538] sm:$0xf]
        %v615 = vunpack.c.l.bf16 %v614
        %v616 = vld [vmem:[%s547] sm:$0xf]
        %v617 = vunpack.c.l.bf16 %v616
        %v618 = vadd.f32 %v615, %v617
        %v619 = vpack.c.bf16 %v618, %v618
        %v620 = vld [vmem:[%s2] sm:$0xf]
        %v621 = vld [vmem:[%s2 + $0x4] sm:$0xf]
        %v622 = vld [vmem:[%s2 + $0x8] sm:$0xf]
        %v623 = vld [vmem:[%s2 + $0xc] sm:$0xf]
        %v628 = vunpack.c.l.b16 %v620
        %v629 = vunpack.c.l.b16 %v621
        %v630 = vunpack.c.l.b16 %v622
        %v631 = vunpack.c.l.b16 %v623
        %v632 = vpack.c.b16 %v629, %v628
        %v633 = vpack.c.b16 %v631, %v630
        %vm636 = vcmask 261120
        %v638 = vsel %vm636, %v619, 0
        %640 = vmatprep.subr.bf16.mxu0 0
        %641 = vmatpush1.bf16.msra.mxu0 0
        %642 = vmatprep.subr.bf16.mxu0 0
        %643 = vmatpush1.bf16.msra.mxu0 0
        %644 = vmatprep.subr.bf16.mxu0 0
        %645 = vmatpush1.bf16.msra.mxu0 0
        %646 = vmatprep.subr.bf16.mxu0 0
        %647 = vmatpush1.bf16.msra.mxu0 0
        %648 = vmatprep.subr.bf16.mxu0 0
        %649 = vmatpush1.bf16.msra.mxu0 0
        %650 = vmatprep.subr.bf16.mxu0 0
        %651 = vmatpush1.bf16.msra.mxu0 0
        %652 = vmatprep.subr.bf16.mxu0 0
        %653 = vmatpush1.bf16.msra.mxu0 %v633
        %654 = vmatprep.subr.bf16.mxu0 0
        %655 = vmatpush1.bf16.msra.mxu0 %v632
        %656 = vmatprep.subr.bf16.mxu0 0
        %657 = vmatpush2.bf16.msra.mxu0 0
        %658 = vmatprep.subr.bf16.mxu0 0
        %659 = vmatpush2.bf16.msra.mxu0 0
        %660 = vmatprep.subr.bf16.mxu0 0
        %661 = vmatpush2.bf16.msra.mxu0 0
        %662 = vmatprep.subr.bf16.mxu0 0
        %663 = vmatpush2.bf16.msra.mxu0 0
        %664 = vmatprep.subr.bf16.mxu0 0
        %665 = vmatpush2.bf16.msra.mxu0 0
        %666 = vmatprep.subr.bf16.mxu0 0
        %667 = vmatpush2.bf16.msra.mxu0 0
        %668 = vmatprep.subr.bf16.mxu0 0
        %669 = vmatpush2.bf16.msra.mxu0 0
        %670 = vmatprep.subr.bf16.mxu0 0
        %671 = vmatpush2.bf16.msra.mxu0 0
        %672 = vmatprep.mubr.bf16.mxu0 0
        %673 = vmatmul.mubr.bf16.gmra.mxu0 %v638
        %v674 = vpop.f32.mrf.mxu0
        %v675 = vadd.f32 0.0, %v674
        %v676 = vpop.f32.mrf.mxu0
        %v677 = vpop.f32.mrf.mxu0
        %v678 = vpop.f32.mrf.mxu0
        %679 = vdwg.mxu0
        %v680 = vld [vmem:[%s5] sm:$0x1]
        %v682 = vlaneseq
        %v683 = vshrl.u32 %v682, 7
        %v684 = vsub.s32 0, %v683
        %v685 = vrot.slane %v680, %v684
        %v687 = vadd.f32 %v675, %v685
        %v688 = vld [vmem:[%s3] sm:$0xf]
        %v689 = vld [vmem:[%s3 + $0x4] sm:$0xf]
        %v690 = vld [vmem:[%s3 + $0x8] sm:$0xf]
        %v691 = vld [vmem:[%s3 + $0xc] sm:$0xf]
        %v692 = vld [vmem:[%s6] sm:$0x1]
        %v694 = vlaneseq
        %v695 = vshrl.u32 %v694, 7
        %v696 = vsub.s32 0, %v695
        %v697 = vrot.slane %v692, %v696
        %v703 = vunpack.c.l.b16 %v688
        %v704 = vunpack.c.l.b16 %v689
        %v705 = vunpack.c.l.b16 %v690
        %v706 = vunpack.c.l.b16 %v691
        %v707 = vpack.c.b16 %v704, %v703
        %v708 = vpack.c.b16 %v706, %v705
        %v712 = vsel %vm636, %v614, 0
        %714 = vmatprep.subr.bf16.mxu0 0
        %715 = vmatpush1.bf16.msra.mxu0 0
        %716 = vmatprep.subr.bf16.mxu0 0
        %717 = vmatpush1.bf16.msra.mxu0 0
        %718 = vmatprep.subr.bf16.mxu0 0
        %719 = vmatpush1.bf16.msra.mxu0 0
        %720 = vmatprep.subr.bf16.mxu0 0
        %721 = vmatpush1.bf16.msra.mxu0 0
        %722 = vmatprep.subr.bf16.mxu0 0
        %723 = vmatpush1.bf16.msra.mxu0 0
        %724 = vmatprep.subr.bf16.mxu0 0
        %725 = vmatpush1.bf16.msra.mxu0 0
        %726 = vmatprep.subr.bf16.mxu0 0
        %727 = vmatpush1.bf16.msra.mxu0 %v708
        %728 = vmatprep.subr.bf16.mxu0 0
        %729 = vmatpush1.bf16.msra.mxu0 %v707
        %730 = vmatprep.subr.bf16.mxu0 0
        %731 = vmatpush2.bf16.msra.mxu0 0
        %732 = vmatprep.subr.bf16.mxu0 0
        %733 = vmatpush2.bf16.msra.mxu0 0
        %734 = vmatprep.subr.bf16.mxu0 0
        %735 = vmatpush2.bf16.msra.mxu0 0
        %736 = vmatprep.subr.bf16.mxu0 0
        %737 = vmatpush2.bf16.msra.mxu0 0
        %738 = vmatprep.subr.bf16.mxu0 0
        %739 = vmatpush2.bf16.msra.mxu0 0
        %740 = vmatprep.subr.bf16.mxu0 0
        %741 = vmatpush2.bf16.msra.mxu0 0
        %742 = vmatprep.subr.bf16.mxu0 0
        %743 = vmatpush2.bf16.msra.mxu0 0
        %744 = vmatprep.subr.bf16.mxu0 0
        %745 = vmatpush2.bf16.msra.mxu0 0
        %746 = vmatprep.mubr.bf16.mxu0 0
        %747 = vmatmul.mubr.bf16.gmra.mxu0 %v712
        %v748 = vpop.f32.mrf.mxu0
        %v749 = vadd.f32 %v697, %v748
        %v750 = vpop.f32.mrf.mxu0
        %v751 = vpop.f32.mrf.mxu0
        %v752 = vpop.f32.mrf.mxu0
        %753 = vdwg.mxu0
        %v754 = vpack.c.bf16 %v687, %v687
        %v755 = vpack.c.bf16 %v675, %v675
        %v756 = vpack.c.bf16 %v749, %v749
        %758 = vrot.lane.b32.xlu0 %v755, 96
        %v759 = vpop.permute.xlu0 %758
        %vm760 = vcmask 64512
        %v762 = vsel %vm760, %v754, 0
        %v765 = vsel %vm760, %v759, 0
        %767 = vmatprep.subr.bf16.mxu0 0
        %768 = vmatpush1.bf16.xpose.msra.mxu0 0
        %769 = vmatprep.subr.bf16.mxu0 0
        %770 = vmatpush1.bf16.xpose.msra.mxu0 0
        %771 = vmatprep.subr.bf16.mxu0 0
        %772 = vmatpush1.bf16.xpose.msra.mxu0 0
        %773 = vmatprep.subr.bf16.mxu0 0
        %774 = vmatpush1.bf16.xpose.msra.mxu0 0
        %775 = vmatprep.subr.bf16.mxu0 0
        %776 = vmatpush1.bf16.xpose.msra.mxu0 0
        %777 = vmatprep.subr.bf16.mxu0 0
        %778 = vmatpush1.bf16.xpose.msra.mxu0 0
        %779 = vmatprep.subr.bf16.mxu0 0
        %780 = vmatpush1.bf16.xpose.msra.mxu0 0
        %781 = vmatprep.subr.bf16.mxu0 0
        %782 = vmatpush1.bf16.xpose.msra.mxu0 %v765
        %783 = vmatprep.subr.bf16.mxu0 0
        %784 = vmatpush2.bf16.xpose.msra.mxu0 0
        %785 = vmatprep.subr.bf16.mxu0 0
        %786 = vmatpush2.bf16.xpose.msra.mxu0 0
        %787 = vmatprep.subr.bf16.mxu0 0
        %788 = vmatpush2.bf16.xpose.msra.mxu0 0
        %789 = vmatprep.subr.bf16.mxu0 0
        %790 = vmatpush2.bf16.xpose.msra.mxu0 0
        %791 = vmatprep.subr.bf16.mxu0 0
        %792 = vmatpush2.bf16.xpose.msra.mxu0 0
        %793 = vmatprep.subr.bf16.mxu0 0
        %794 = vmatpush2.bf16.xpose.msra.mxu0 0
        %795 = vmatprep.subr.bf16.mxu0 0
        %796 = vmatpush2.bf16.xpose.msra.mxu0 0
        %797 = vmatprep.subr.bf16.mxu0 0
        %798 = vmatpush2.bf16.xpose.msra.mxu0 0
        %799 = vmatprep.mubr.bf16.mxu0 0
        %800 = vmatmul.mubr.bf16.gmra.mxu0 %v762
        %v801 = vpop.f32.mrf.mxu0
        %v802 = vadd.f32 0.0, %v801
        %v803 = vpop.f32.mrf.mxu0
        %v804 = vpop.f32.mrf.mxu0
        %v805 = vpop.f32.mrf.mxu0
        %806 = vdwg.mxu0
        %v807 = vsel %vm760, %v802, -inf
        %808 = vmax.xlane.f32.xlu0 %v807
        %v809 = vpop.xlane.xlu0 %808
        %v810 = vsub.f32 %v802, %v809
        %v811 = vmul.f32 %v810, 1.442695
        %v812 = vpow.pop %v811
        %v813 = vsel %vm760, %v812, 0.0
        %814 = vadd.xlane.f32.xlu0 %v813
        %v815 = vpop.xlane.xlu0 %814
        %v816 = vrcp.pop %v815
        %v817 = vmul.f32 %v812, %v816
        %v818 = vpack.c.bf16 %v817, %v817
        %v820 = vsel %vm760, %v818, 0
        %vm822 = vcmask 1043456
        %v824 = vsel %vm822, %v756, 0
        %826 = vmatprep.subr.bf16.mxu0 0
        %827 = vmatpush1.bf16.msra.mxu0 0
        %828 = vmatprep.subr.bf16.mxu0 0
        %829 = vmatpush1.bf16.msra.mxu0 0
        %830 = vmatprep.subr.bf16.mxu0 0
        %831 = vmatpush1.bf16.msra.mxu0 0
        %832 = vmatprep.subr.bf16.mxu0 0
        %833 = vmatpush1.bf16.msra.mxu0 0
        %834 = vmatprep.subr.bf16.mxu0 0
        %835 = vmatpush1.bf16.msra.mxu0 0
        %836 = vmatprep.subr.bf16.mxu0 0
        %837 = vmatpush1.bf16.msra.mxu0 0
        %838 = vmatprep.subr.bf16.mxu0 0
        %839 = vmatpush1.bf16.msra.mxu0 0
        %840 = vmatprep.subr.bf16.mxu0 0
        %841 = vmatpush1.bf16.msra.mxu0 %v824
        %842 = vmatprep.subr.bf16.mxu0 0
        %843 = vmatpush2.bf16.msra.mxu0 0
        %844 = vmatprep.subr.bf16.mxu0 0
        %845 = vmatpush2.bf16.msra.mxu0 0
        %846 = vmatprep.subr.bf16.mxu0 0
        %847 = vmatpush2.bf16.msra.mxu0 0
        %848 = vmatprep.subr.bf16.mxu0 0
        %849 = vmatpush2.bf16.msra.mxu0 0
        %850 = vmatprep.subr.bf16.mxu0 0
        %851 = vmatpush2.bf16.msra.mxu0 0
        %852 = vmatprep.subr.bf16.mxu0 0
        %853 = vmatpush2.bf16.msra.mxu0 0
        %854 = vmatprep.subr.bf16.mxu0 0
        %855 = vmatpush2.bf16.msra.mxu0 0
        %856 = vmatprep.subr.bf16.mxu0 0
        %857 = vmatpush2.bf16.msra.mxu0 0
        %858 = vmatprep.mubr.bf16.mxu0 0
        %859 = vmatmul.mubr.bf16.gmra.mxu0 %v820
        %v860 = vpop.f32.mrf.mxu0
        %v861 = vadd.f32 0.0, %v860
        %v862 = vpop.f32.mrf.mxu0
        %v863 = vpop.f32.mrf.mxu0
        %v864 = vpop.f32.mrf.mxu0
        %865 = vdwg.mxu0
        %v866 = vpack.c.bf16 %v861, %v861
        %vm867 = vcmask 60416
        %868 = vst.msk [vmem:[#allocation2] sm:$0xf] %vm867, %v866
        %870 = vrot.lane.b32.xlu0 %v754, 120
        %v871 = vpop.permute.xlu0 %870
        %872 = vrot.lane.b32.xlu0 %v755, 88
        %v873 = vpop.permute.xlu0 %872
        %v875 = vsel %vm760, %v871, 0
        %v878 = vsel %vm760, %v873, 0
        %880 = vmatprep.subr.bf16.mxu0 0
        %881 = vmatpush1.bf16.xpose.msra.mxu0 0
        %882 = vmatprep.subr.bf16.mxu0 0
        %883 = vmatpush1.bf16.xpose.msra.mxu0 0
        %884 = vmatprep.subr.bf16.mxu0 0
        %885 = vmatpush1.bf16.xpose.msra.mxu0 0
        %886 = vmatprep.subr.bf16.mxu0 0
        %887 = vmatpush1.bf16.xpose.msra.mxu0 0
        %888 = vmatprep.subr.bf16.mxu0 0
        %889 = vmatpush1.bf16.xpose.msra.mxu0 0
        %890 = vmatprep.subr.bf16.mxu0 0
        %891 = vmatpush1.bf16.xpose.msra.mxu0 0
        %892 = vmatprep.subr.bf16.mxu0 0
        %893 = vmatpush1.bf16.xpose.msra.mxu0 0
        %894 = vmatprep.subr.bf16.mxu0 0
        %895 = vmatpush1.bf16.xpose.msra.mxu0 %v878
        %896 = vmatprep.subr.bf16.mxu0 0
        %897 = vmatpush2.bf16.xpose.msra.mxu0 0
        %898 = vmatprep.subr.bf16.mxu0 0
        %899 = vmatpush2.bf16.xpose.msra.mxu0 0
        %900 = vmatprep.subr.bf16.mxu0 0
        %901 = vmatpush2.bf16.xpose.msra.mxu0 0
        %902 = vmatprep.subr.bf16.mxu0 0
        %903 = vmatpush2.bf16.xpose.msra.mxu0 0
        %904 = vmatprep.subr.bf16.mxu0 0
        %905 = vmatpush2.bf16.xpose.msra.mxu0 0
        %906 = vmatprep.subr.bf16.mxu0 0
        %907 = vmatpush2.bf16.xpose.msra.mxu0 0
        %908 = vmatprep.subr.bf16.mxu0 0
        %909 = vmatpush2.bf16.xpose.msra.mxu0 0
        %910 = vmatprep.subr.bf16.mxu0 0
        %911 = vmatpush2.bf16.xpose.msra.mxu0 0
        %912 = vmatprep.mubr.bf16.mxu0 0
        %913 = vmatmul.mubr.bf16.gmra.mxu0 %v875
        %v914 = vpop.f32.mrf.mxu0
        %v915 = vadd.f32 0.0, %v914
        %v916 = vpop.f32.mrf.mxu0
        %v917 = vpop.f32.mrf.mxu0
        %v918 = vpop.f32.mrf.mxu0
        %919 = vdwg.mxu0
        %v920 = vsel %vm760, %v915, -inf
        %921 = vmax.xlane.f32.xlu0 %v920
        %v922 = vpop.xlane.xlu0 %921
        %v923 = vsub.f32 %v915, %v922
        %v924 = vmul.f32 %v923, 1.442695
        %v925 = vpow.pop %v924
        %v926 = vsel %vm760, %v925, 0.0
        %927 = vadd.xlane.f32.xlu0 %v926
        %v928 = vpop.xlane.xlu0 %927
        %v929 = vrcp.pop %v928
        %v930 = vmul.f32 %v925, %v929
        %v931 = vpack.c.bf16 %v930, %v930
        %933 = vrot.lane.b32.xlu0 %v756, 120
        %v934 = vpop.permute.xlu0 %933
        %v936 = vsel %vm760, %v931, 0
        %v939 = vsel %vm822, %v934, 0
        %941 = vmatprep.subr.bf16.mxu0 0
        %942 = vmatpush1.bf16.msra.mxu0 0
        %943 = vmatprep.subr.bf16.mxu0 0
        %944 = vmatpush1.bf16.msra.mxu0 0
        %945 = vmatprep.subr.bf16.mxu0 0
        %946 = vmatpush1.bf16.msra.mxu0 0
        %947 = vmatprep.subr.bf16.mxu0 0
        %948 = vmatpush1.bf16.msra.mxu0 0
        %949 = vmatprep.subr.bf16.mxu0 0
        %950 = vmatpush1.bf16.msra.mxu0 0
        %951 = vmatprep.subr.bf16.mxu0 0
        %952 = vmatpush1.bf16.msra.mxu0 0
        %953 = vmatprep.subr.bf16.mxu0 0
        %954 = vmatpush1.bf16.msra.mxu0 0
        %955 = vmatprep.subr.bf16.mxu0 0
        %956 = vmatpush1.bf16.msra.mxu0 %v939
        %957 = vmatprep.subr.bf16.mxu0 0
        %958 = vmatpush2.bf16.msra.mxu0 0
        %959 = vmatprep.subr.bf16.mxu0 0
        %960 = vmatpush2.bf16.msra.mxu0 0
        %961 = vmatprep.subr.bf16.mxu0 0
        %962 = vmatpush2.bf16.msra.mxu0 0
        %963 = vmatprep.subr.bf16.mxu0 0
        %964 = vmatpush2.bf16.msra.mxu0 0
        %965 = vmatprep.subr.bf16.mxu0 0
        %966 = vmatpush2.bf16.msra.mxu0 0
        %967 = vmatprep.subr.bf16.mxu0 0
        %968 = vmatpush2.bf16.msra.mxu0 0
        %969 = vmatprep.subr.bf16.mxu0 0
        %970 = vmatpush2.bf16.msra.mxu0 0
        %971 = vmatprep.subr.bf16.mxu0 0
        %972 = vmatpush2.bf16.msra.mxu0 0
        %973 = vmatprep.mubr.bf16.mxu0 0
        %974 = vmatmul.mubr.bf16.gmra.mxu0 %v936
        %v975 = vpop.f32.mrf.mxu0
        %v976 = vadd.f32 0.0, %v975
        %v977 = vpop.f32.mrf.mxu0
        %v978 = vpop.f32.mrf.mxu0
        %v979 = vpop.f32.mrf.mxu0
        %980 = vdwg.mxu0
        %v981 = vpack.c.bf16 %v976, %v976
        %v983 = vunpack.c.l.b16 %v981
        %v984 = vpack.c.b16 %v983, %v983
        %985 = vrot.lane.b32.xlu0 %v984, 8
        %v986 = vpop.permute.xlu0 %985
        %vm988 = vcmask 126016
        %989 = vst.msk [vmem:[#allocation2] sm:$0xf] %vm988, %v986
        %990 = vrot.lane.b32.xlu0 %v754, 112
        %v991 = vpop.permute.xlu0 %990
        %992 = vrot.lane.b32.xlu0 %v755, 80
        %v993 = vpop.permute.xlu0 %992
        %v995 = vsel %vm760, %v991, 0
        %v998 = vsel %vm760, %v993, 0
        %1000 = vmatprep.subr.bf16.mxu0 0
        %1001 = vmatpush1.bf16.xpose.msra.mxu0 0
        %1002 = vmatprep.subr.bf16.mxu0 0
        %1003 = vmatpush1.bf16.xpose.msra.mxu0 0
        %1004 = vmatprep.subr.bf16.mxu0 0
        %1005 = vmatpush1.bf16.xpose.msra.mxu0 0
        %1006 = vmatprep.subr.bf16.mxu0 0
        %1007 = vmatpush1.bf16.xpose.msra.mxu0 0
        %1008 = vmatprep.subr.bf16.mxu0 0
        %1009 = vmatpush1.bf16.xpose.msra.mxu0 0
        %1010 = vmatprep.subr.bf16.mxu0 0
        %1011 = vmatpush1.bf16.xpose.msra.mxu0 0
        %1012 = vmatprep.subr.bf16.mxu0 0
        %1013 = vmatpush1.bf16.xpose.msra.mxu0 0
        %1014 = vmatprep.subr.bf16.mxu0 0
        %1015 = vmatpush1.bf16.xpose.msra.mxu0 %v998
        %1016 = vmatprep.subr.bf16.mxu0 0
        %1017 = vmatpush2.bf16.xpose.msra.mxu0 0
        %1018 = vmatprep.subr.bf16.mxu0 0
        %1019 = vmatpush2.bf16.xpose.msra.mxu0 0
        %1020 = vmatprep.subr.bf16.mxu0 0
        %1021 = vmatpush2.bf16.xpose.msra.mxu0 0
        %1022 = vmatprep.subr.bf16.mxu0 0
        %1023 = vmatpush2.bf16.xpose.msra.mxu0 0
        %1024 = vmatprep.subr.bf16.mxu0 0
        %1025 = vmatpush2.bf16.xpose.msra.mxu0 0
        %1026 = vmatprep.subr.bf16.mxu0 0
        %1027 = vmatpush2.bf16.xpose.msra.mxu0 0
        %1028 = vmatprep.subr.bf16.mxu0 0
        %1029 = vmatpush2.bf16.xpose.msra.mxu0 0
        %1030 = vmatprep.subr.bf16.mxu0 0
        %1031 = vmatpush2.bf16.xpose.msra.mxu0 0
        %1032 = vmatprep.mubr.bf16.mxu0 0
        %1033 = vmatmul.mubr.bf16.gmra.mxu0 %v995
        %v1034 = vpop.f32.mrf.mxu0
        %v1035 = vadd.f32 0.0, %v1034
        %v1036 = vpop.f32.mrf.mxu0
        %v1037 = vpop.f32.mrf.mxu0
        %v1038 = vpop.f32.mrf.mxu0
        %1039 = vdwg.mxu0
        %v1040 = vsel %vm760, %v1035, -inf
        %1041 = vmax.xlane.f32.xlu0 %v1040
        %v1042 = vpop.xlane.xlu0 %1041
        %v1043 = vsub.f32 %v1035, %v1042
        %v1044 = vmul.f32 %v1043, 1.442695
        %v1045 = vpow.pop %v1044
        %v1046 = vsel %vm760, %v1045, 0.0
        %1047 = vadd.xlane.f32.xlu0 %v1046
        %v1048 = vpop.xlane.xlu0 %1047
        %v1049 = vrcp.pop %v1048
        %v1050 = vmul.f32 %v1045, %v1049
        %v1051 = vpack.c.bf16 %v1050, %v1050
        %1052 = vrot.lane.b32.xlu0 %v756, 112
        %v1053 = vpop.permute.xlu0 %1052
        %v1055 = vsel %vm760, %v1051, 0
        %v1058 = vsel %vm822, %v1053, 0
        %1060 = vmatprep.subr.bf16.mxu0 0
        %1061 = vmatpush1.bf16.msra.mxu0 0
        %1062 = vmatprep.subr.bf16.mxu0 0
        %1063 = vmatpush1.bf16.msra.mxu0 0
        %1064 = vmatprep.subr.bf16.mxu0 0
        %1065 = vmatpush1.bf16.msra.mxu0 0
        %1066 = vmatprep.subr.bf16.mxu0 0
        %1067 = vmatpush1.bf16.msra.mxu0 0
        %1068 = vmatprep.subr.bf16.mxu0 0
        %1069 = vmatpush1.bf16.msra.mxu0 0
        %1070 = vmatprep.subr.bf16.mxu0 0
        %1071 = vmatpush1.bf16.msra.mxu0 0
        %1072 = vmatprep.subr.bf16.mxu0 0
        %1073 = vmatpush1.bf16.msra.mxu0 0
        %1074 = vmatprep.subr.bf16.mxu0 0
        %1075 = vmatpush1.bf16.msra.mxu0 %v1058
        %1076 = vmatprep.subr.bf16.mxu0 0
        %1077 = vmatpush2.bf16.msra.mxu0 0
        %1078 = vmatprep.subr.bf16.mxu0 0
        %1079 = vmatpush2.bf16.msra.mxu0 0
        %1080 = vmatprep.subr.bf16.mxu0 0
        %1081 = vmatpush2.bf16.msra.mxu0 0
        %1082 = vmatprep.subr.bf16.mxu0 0
        %1083 = vmatpush2.bf16.msra.mxu0 0
        %1084 = vmatprep.subr.bf16.mxu0 0
        %1085 = vmatpush2.bf16.msra.mxu0 0
        %1086 = vmatprep.subr.bf16.mxu0 0
        %1087 = vmatpush2.bf16.msra.mxu0 0
        %1088 = vmatprep.subr.bf16.mxu0 0
        %1089 = vmatpush2.bf16.msra.mxu0 0
        %1090 = vmatprep.subr.bf16.mxu0 0
        %1091 = vmatpush2.bf16.msra.mxu0 0
        %1092 = vmatprep.mubr.bf16.mxu0 0
        %1093 = vmatmul.mubr.bf16.gmra.mxu0 %v1055
        %v1094 = vpop.f32.mrf.mxu0
        %v1095 = vadd.f32 0.0, %v1094
        %v1096 = vpop.f32.mrf.mxu0
        %v1097 = vpop.f32.mrf.mxu0
        %v1098 = vpop.f32.mrf.mxu0
        %1099 = vdwg.mxu0
        %v1100 = vpack.c.bf16 %v1095, %v1095
        %v1102 = vunpack.c.l.b16 %v1100
        %v1103 = vpack.c.b16 %v1102, %v1102
        %1104 = vrot.lane.b32.xlu0 %v1103, 16
        %v1105 = vpop.permute.xlu0 %1104
        %vm1107 = vcmask 191616
        %1108 = vst.msk [vmem:[#allocation2] sm:$0xf] %vm1107, %v1105
        %1109 = vrot.lane.b32.xlu0 %v754, 104
        %v1110 = vpop.permute.xlu0 %1109
        %1111 = vrot.lane.b32.xlu0 %v755, 72
        %v1112 = vpop.permute.xlu0 %1111
        %v1114 = vsel %vm760, %v1110, 0
        %v1117 = vsel %vm760, %v1112, 0
        %1119 = vmatprep.subr.bf16.mxu0 0
        %1120 = vmatpush1.bf16.xpose.msra.mxu0 0
        %1121 = vmatprep.subr.bf16.mxu0 0
        %1122 = vmatpush1.bf16.xpose.msra.mxu0 0
        %1123 = vmatprep.subr.bf16.mxu0 0
        %1124 = vmatpush1.bf16.xpose.msra.mxu0 0
        %1125 = vmatprep.subr.bf16.mxu0 0
        %1126 = vmatpush1.bf16.xpose.msra.mxu0 0
        %1127 = vmatprep.subr.bf16.mxu0 0
        %1128 = vmatpush1.bf16.xpose.msra.mxu0 0
        %1129 = vmatprep.subr.bf16.mxu0 0
        %1130 = vmatpush1.bf16.xpose.msra.mxu0 0
        %1131 = vmatprep.subr.bf16.mxu0 0
        %1132 = vmatpush1.bf16.xpose.msra.mxu0 0
        %1133 = vmatprep.subr.bf16.mxu0 0
        %1134 = vmatpush1.bf16.xpose.msra.mxu0 %v1117
        %1135 = vmatprep.subr.bf16.mxu0 0
        %1136 = vmatpush2.bf16.xpose.msra.mxu0 0
        %1137 = vmatprep.subr.bf16.mxu0 0
        %1138 = vmatpush2.bf16.xpose.msra.mxu0 0
        %1139 = vmatprep.subr.bf16.mxu0 0
        %1140 = vmatpush2.bf16.xpose.msra.mxu0 0
        %1141 = vmatprep.subr.bf16.mxu0 0
        %1142 = vmatpush2.bf16.xpose.msra.mxu0 0
        %1143 = vmatprep.subr.bf16.mxu0 0
        %1144 = vmatpush2.bf16.xpose.msra.mxu0 0
        %1145 = vmatprep.subr.bf16.mxu0 0
        %1146 = vmatpush2.bf16.xpose.msra.mxu0 0
        %1147 = vmatprep.subr.bf16.mxu0 0
        %1148 = vmatpush2.bf16.xpose.msra.mxu0 0
        %1149 = vmatprep.subr.bf16.mxu0 0
        %1150 = vmatpush2.bf16.xpose.msra.mxu0 0
        %1151 = vmatprep.mubr.bf16.mxu0 0
        %1152 = vmatmul.mubr.bf16.gmra.mxu0 %v1114
        %v1153 = vpop.f32.mrf.mxu0
        %v1154 = vadd.f32 0.0, %v1153
        %v1155 = vpop.f32.mrf.mxu0
        %v1156 = vpop.f32.mrf.mxu0
        %v1157 = vpop.f32.mrf.mxu0
        %1158 = vdwg.mxu0
        %v1159 = vsel %vm760, %v1154, -inf
        %1160 = vmax.xlane.f32.xlu0 %v1159
        %v1161 = vpop.xlane.xlu0 %1160
        %v1162 = vsub.f32 %v1154, %v1161
        %v1163 = vmul.f32 %v1162, 1.442695
        %v1164 = vpow.pop %v1163
        %v1165 = vsel %vm760, %v1164, 0.0
        %1166 = vadd.xlane.f32.xlu0 %v1165
        %v1167 = vpop.xlane.xlu0 %1166
        %v1168 = vrcp.pop %v1167
        %v1169 = vmul.f32 %v1164, %v1168
        %v1170 = vpack.c.bf16 %v1169, %v1169
        %1171 = vrot.lane.b32.xlu0 %v756, 104
        %v1172 = vpop.permute.xlu0 %1171
        %v1174 = vsel %vm760, %v1170, 0
        %v1177 = vsel %vm822, %v1172, 0
        %1179 = vmatprep.subr.bf16.mxu0 0
        %1180 = vmatpush1.bf16.msra.mxu0 0
        %1181 = vmatprep.subr.bf16.mxu0 0
        %1182 = vmatpush1.bf16.msra.mxu0 0
        %1183 = vmatprep.subr.bf16.mxu0 0
        %1184 = vmatpush1.bf16.msra.mxu0 0
        %1185 = vmatprep.subr.bf16.mxu0 0
        %1186 = vmatpush1.bf16.msra.mxu0 0
        %1187 = vmatprep.subr.bf16.mxu0 0
        %1188 = vmatpush1.bf16.msra.mxu0 0
        %1189 = vmatprep.subr.bf16.mxu0 0
        %1190 = vmatpush1.bf16.msra.mxu0 0
        %1191 = vmatprep.subr.bf16.mxu0 0
        %1192 = vmatpush1.bf16.msra.mxu0 0
        %1193 = vmatprep.subr.bf16.mxu0 0
        %1194 = vmatpush1.bf16.msra.mxu0 %v1177
        %1195 = vmatprep.subr.bf16.mxu0 0
        %1196 = vmatpush2.bf16.msra.mxu0 0
        %1197 = vmatprep.subr.bf16.mxu0 0
        %1198 = vmatpush2.bf16.msra.mxu0 0
        %1199 = vmatprep.subr.bf16.mxu0 0
        %1200 = vmatpush2.bf16.msra.mxu0 0
        %1201 = vmatprep.subr.bf16.mxu0 0
        %1202 = vmatpush2.bf16.msra.mxu0 0
        %1203 = vmatprep.subr.bf16.mxu0 0
        %1204 = vmatpush2.bf16.msra.mxu0 0
        %1205 = vmatprep.subr.bf16.mxu0 0
        %1206 = vmatpush2.bf16.msra.mxu0 0
        %1207 = vmatprep.subr.bf16.mxu0 0
        %1208 = vmatpush2.bf16.msra.mxu0 0
        %1209 = vmatprep.subr.bf16.mxu0 0
        %1210 = vmatpush2.bf16.msra.mxu0 0
        %1211 = vmatprep.mubr.bf16.mxu0 0
        %1212 = vmatmul.mubr.bf16.gmra.mxu0 %v1174
        %v1213 = vpop.f32.mrf.mxu0
        %v1214 = vadd.f32 0.0, %v1213
        %v1215 = vpop.f32.mrf.mxu0
        %v1216 = vpop.f32.mrf.mxu0
        %v1217 = vpop.f32.mrf.mxu0
        %1218 = vdwg.mxu0
        %v1219 = vpack.c.bf16 %v1214, %v1214
        %v1221 = vunpack.c.l.b16 %v1219
        %v1222 = vpack.c.b16 %v1221, %v1221
        %1223 = vrot.lane.b32.xlu0 %v1222, 24
        %v1224 = vpop.permute.xlu0 %1223
        %vm1226 = vcmask 257216
        %1227 = vst.msk [vmem:[#allocation2] sm:$0xf] %vm1226, %v1224
        %v1228 = vld [vmem:[#allocation2] sm:$0xf]
        %v1229 = vld [vmem:[%s4] sm:$0xf]
        %v1230 = vld [vmem:[%s4 + $0x4] sm:$0xf]
        %v1231 = vld [vmem:[%s4 + $0x8] sm:$0xf]
        %v1232 = vld [vmem:[%s4 + $0xc] sm:$0xf]
        %v1233 = vld [vmem:[#allocation8] sm:$0x1]
        %v1235 = vlaneseq
        %v1236 = vshrl.u32 %v1235, 7
        %v1237 = vsub.s32 0, %v1236
        %v1238 = vrot.slane %v1233, %v1237
        %v1244 = vunpack.c.l.b16 %v1229
        %v1245 = vunpack.c.l.b16 %v1230
        %v1246 = vunpack.c.l.b16 %v1231
        %v1247 = vunpack.c.l.b16 %v1232
        %v1248 = vpack.c.b16 %v1245, %v1244
        %v1249 = vpack.c.b16 %v1247, %v1246
        %v1253 = vsel %vm636, %v1228, 0
        %1255 = vmatprep.subr.bf16.mxu0 0
        %1256 = vmatpush1.bf16.msra.mxu0 0
        %1257 = vmatprep.subr.bf16.mxu0 0
        %1258 = vmatpush1.bf16.msra.mxu0 0
        %1259 = vmatprep.subr.bf16.mxu0 0
        %1260 = vmatpush1.bf16.msra.mxu0 0
        %1261 = vmatprep.subr.bf16.mxu0 0
        %1262 = vmatpush1.bf16.msra.mxu0 0
        %1263 = vmatprep.subr.bf16.mxu0 0
        %1264 = vmatpush1.bf16.msra.mxu0 0
        %1265 = vmatprep.subr.bf16.mxu0 0
        %1266 = vmatpush1.bf16.msra.mxu0 0
        %1267 = vmatprep.subr.bf16.mxu0 0
        %1268 = vmatpush1.bf16.msra.mxu0 %v1249
        %1269 = vmatprep.subr.bf16.mxu0 0
        %1270 = vmatpush1.bf16.msra.mxu0 %v1248
        %1271 = vmatprep.subr.bf16.mxu0 0
        %1272 = vmatpush2.bf16.msra.mxu0 0
        %1273 = vmatprep.subr.bf16.mxu0 0
        %1274 = vmatpush2.bf16.msra.mxu0 0
        %1275 = vmatprep.subr.bf16.mxu0 0
        %1276 = vmatpush2.bf16.msra.mxu0 0
        %1277 = vmatprep.subr.bf16.mxu0 0
        %1278 = vmatpush2.bf16.msra.mxu0 0
        %1279 = vmatprep.subr.bf16.mxu0 0
        %1280 = vmatpush2.bf16.msra.mxu0 0
        %1281 = vmatprep.subr.bf16.mxu0 0
        %1282 = vmatpush2.bf16.msra.mxu0 0
        %1283 = vmatprep.subr.bf16.mxu0 0
        %1284 = vmatpush2.bf16.msra.mxu0 0
        %1285 = vmatprep.subr.bf16.mxu0 0
        %1286 = vmatpush2.bf16.msra.mxu0 0
        %1287 = vmatprep.mubr.bf16.mxu0 0
        %1288 = vmatmul.mubr.bf16.gmra.mxu0 %v1253
        %v1289 = vpop.f32.mrf.mxu0
        %v1290 = vadd.f32 %v1238, %v1289
        %v1291 = vpop.f32.mrf.mxu0
        %v1292 = vpop.f32.mrf.mxu0
        %v1293 = vpop.f32.mrf.mxu0
        %1294 = vdwg.mxu0
        %v1295 = vadd.f32 %v615, %v1290
        %v1296 = vld [vmem:[%s12] sm:$0x1]
        %v1297 = vld [vmem:[%s13] sm:$0x1]
        %v1298 = vsel %vm636, %v1295, 0.0
        %1299 = vadd.xlane.f32.xlu0 %v1298
        %v1300 = vpop.xlane.xlu0 %1299
        %v1301 = vrcp.pop 32.0
        %v1302 = vmul.f32 %v1300, %v1301
        %v1303 = vsub.f32 %v1295, %v1302
        %v1304 = vmul.f32 %v1303, %v1303
        %v1305 = vsel %vm636, %v1304, 0.0
        %1306 = vadd.xlane.f32.xlu0 %v1305
        %v1307 = vpop.xlane.xlu0 %1306
        %v1308 = vmul.f32 %v1307, %v1301
        %v1309 = vadd.f32 %v1308, 1e-05
        %v1310 = vrsqrt.pop %v1309
        %v1311 = vmul.f32 %v1303, %v1310
        %v1313 = vlaneseq
        %v1314 = vshrl.u32 %v1313, 7
        %v1315 = vsub.s32 0, %v1314
        %v1316 = vrot.slane %v1296, %v1315
        %v1318 = vmul.f32 %v1311, %v1316
        %v1320 = vlaneseq
        %v1321 = vshrl.u32 %v1320, 7
        %v1322 = vsub.s32 0, %v1321
        %v1323 = vrot.slane %v1297, %v1322
        %v1325 = vadd.f32 %v1318, %v1323
        %v1326 = vpack.c.bf16 %v1325, %v1325
        %v1327 = vld [vmem:[#allocation9] sm:$0xf]
        %v1328 = vld [vmem:[#allocation9 + $0x4] sm:$0xf]
        %v1329 = vld [vmem:[#allocation9 + $0x8] sm:$0xf]
        %v1330 = vld [vmem:[#allocation9 + $0xc] sm:$0xf]
        %v1331 = vld [vmem:[#allocation11] sm:$0x1]
        %v1333 = vlaneseq
        %v1334 = vshrl.u32 %v1333, 7
        %v1335 = vsub.s32 0, %v1334
        %v1336 = vrot.slane %v1331, %v1335
        %v1342 = vunpack.c.l.b16 %v1327
        %v1343 = vunpack.c.l.b16 %v1328
        %v1344 = vunpack.c.l.b16 %v1329
        %v1345 = vunpack.c.l.b16 %v1330
        %v1346 = vpack.c.b16 %v1343, %v1342
        %v1347 = vpack.c.b16 %v1345, %v1344
        %v1351 = vsel %vm636, %v1326, 0
        %1353 = vmatprep.subr.bf16.mxu0 0
        %1354 = vmatpush1.bf16.msra.mxu0 0
        %1355 = vmatprep.subr.bf16.mxu0 0
        %1356 = vmatpush1.bf16.msra.mxu0 0
        %1357 = vmatprep.subr.bf16.mxu0 0
        %1358 = vmatpush1.bf16.msra.mxu0 0
        %1359 = vmatprep.subr.bf16.mxu0 0
        %1360 = vmatpush1.bf16.msra.mxu0 0
        %1361 = vmatprep.subr.bf16.mxu0 0
        %1362 = vmatpush1.bf16.msra.mxu0 0
        %1363 = vmatprep.subr.bf16.mxu0 0
        %1364 = vmatpush1.bf16.msra.mxu0 0
        %1365 = vmatprep.subr.bf16.mxu0 0
        %1366 = vmatpush1.bf16.msra.mxu0 %v1347
        %1367 = vmatprep.subr.bf16.mxu0 0
        %1368 = vmatpush1.bf16.msra.mxu0 %v1346
        %1369 = vmatprep.subr.bf16.mxu0 0
        %1370 = vmatpush2.bf16.msra.mxu0 0
        %1371 = vmatprep.subr.bf16.mxu0 0
        %1372 = vmatpush2.bf16.msra.mxu0 0
        %1373 = vmatprep.subr.bf16.mxu0 0
        %1374 = vmatpush2.bf16.msra.mxu0 0
        %1375 = vmatprep.subr.bf16.mxu0 0
        %1376 = vmatpush2.bf16.msra.mxu0 0
        %1377 = vmatprep.subr.bf16.mxu0 0
        %1378 = vmatpush2.bf16.msra.mxu0 0
        %1379 = vmatprep.subr.bf16.mxu0 0
        %1380 = vmatpush2.bf16.msra.mxu0 0
        %1381 = vmatprep.subr.bf16.mxu0 0
        %1382 = vmatpush2.bf16.msra.mxu0 0
        %1383 = vmatprep.subr.bf16.mxu0 0
        %1384 = vmatpush2.bf16.msra.mxu0 0
        %1385 = vmatprep.mubr.bf16.mxu0 0
        %1386 = vmatmul.mubr.bf16.gmra.mxu0 %v1351
        %v1387 = vpop.f32.mrf.mxu0
        %v1388 = vadd.f32 %v1336, %v1387
        %v1389 = vpop.f32.mrf.mxu0
        %v1390 = vpop.f32.mrf.mxu0
        %v1391 = vpop.f32.mrf.mxu0
        %1392 = vdwg.mxu0
        %v1393 = vmax.f32 %v1388, 0.0
        %v1394 = vpack.c.bf16 %v1393, %v1393
        %v1395 = vld [vmem:[%s10] sm:$0xf]
        %v1396 = vld [vmem:[%s10 + $0x4] sm:$0xf]
        %v1397 = vld [vmem:[%s10 + $0x8] sm:$0xf]
        %v1398 = vld [vmem:[%s10 + $0xc] sm:$0xf]
        %v1399 = vld [vmem:[%s10 + $0x10] sm:$0xf]
        %v1400 = vld [vmem:[%s10 + $0x14] sm:$0xf]
        %v1401 = vld [vmem:[%s10 + $0x18] sm:$0xf]
        %v1402 = vld [vmem:[%s10 + $0x1c] sm:$0xf]
        %v1403 = vld [vmem:[%s11] sm:$0x1]
        %v1405 = vlaneseq
        %v1406 = vshrl.u32 %v1405, 7
        %v1407 = vsub.s32 0, %v1406
        %v1408 = vrot.slane %v1403, %v1407
        %v1418 = vunpack.c.l.b16 %v1395
        %v1419 = vunpack.c.l.b16 %v1396
        %v1420 = vunpack.c.l.b16 %v1397
        %v1421 = vunpack.c.l.b16 %v1398
        %v1422 = vunpack.c.l.b16 %v1399
        %v1423 = vunpack.c.l.b16 %v1400
        %v1424 = vunpack.c.l.b16 %v1401
        %v1425 = vunpack.c.l.b16 %v1402
        %v1426 = vpack.c.b16 %v1419, %v1418
        %v1427 = vpack.c.b16 %v1421, %v1420
        %v1428 = vpack.c.b16 %v1423, %v1422
        %v1429 = vpack.c.b16 %v1425, %v1424
        %vm1434 = vcmask 523264
        %v1436 = vsel %vm1434, %v1394, 0
        %1438 = vmatprep.subr.bf16.mxu0 0
        %1439 = vmatpush1.bf16.msra.mxu0 0
        %1440 = vmatprep.subr.bf16.mxu0 0
        %1441 = vmatpush1.bf16.msra.mxu0 0
        %1442 = vmatprep.subr.bf16.mxu0 0
        %1443 = vmatpush1.bf16.msra.mxu0 0
        %1444 = vmatprep.subr.bf16.mxu0 0
        %1445 = vmatpush1.bf16.msra.mxu0 0
        %1446 = vmatprep.subr.bf16.mxu0 0
        %1447 = vmatpush1.bf16.msra.mxu0 %v1429
        %1448 = vmatprep.subr.bf16.mxu0 0
        %1449 = vmatpush1.bf16.msra.mxu0 %v1428
        %1450 = vmatprep.subr.bf16.mxu0 0
        %1451 = vmatpush1.bf16.msra.mxu0 %v1427
        %1452 = vmatprep.subr.bf16.mxu0 0
        %1453 = vmatpush1.bf16.msra.mxu0 %v1426
        %1454 = vmatprep.subr.bf16.mxu0 0
        %1455 = vmatpush2.bf16.msra.mxu0 0
        %1456 = vmatprep.subr.bf16.mxu0 0
        %1457 = vmatpush2.bf16.msra.mxu0 0
        %1458 = vmatprep.subr.bf16.mxu0 0
        %1459 = vmatpush2.bf16.msra.mxu0 0
        %1460 = vmatprep.subr.bf16.mxu0 0
        %1461 = vmatpush2.bf16.msra.mxu0 0
        %1462 = vmatprep.subr.bf16.mxu0 0
        %1463 = vmatpush2.bf16.msra.mxu0 0
        %1464 = vmatprep.subr.bf16.mxu0 0
        %1465 = vmatpush2.bf16.msra.mxu0 0
        %1466 = vmatprep.subr.bf16.mxu0 0
        %1467 = vmatpush2.bf16.msra.mxu0 0
        %1468 = vmatprep.subr.bf16.mxu0 0
        %1469 = vmatpush2.bf16.msra.mxu0 0
        %1470 = vmatprep.mubr.bf16.mxu0 0
        %1471 = vmatmul.mubr.bf16.gmra.mxu0 %v1436
        %v1472 = vpop.f32.mrf.mxu0
        %v1473 = vadd.f32 %v1408, %v1472
        %v1474 = vpop.f32.mrf.mxu0
        %v1475 = vpop.f32.mrf.mxu0
        %v1476 = vpop.f32.mrf.mxu0
        %1477 = vdwg.mxu0
        %v1478 = vadd.f32 %v1325, %v1473
        %v1479 = vld [vmem:[%s14] sm:$0x1]
        %v1480 = vld [vmem:[%s15] sm:$0x1]
        %v1481 = vsel %vm636, %v1478, 0.0
        %1482 = vadd.xlane.f32.xlu0 %v1481
        %v1483 = vpop.xlane.xlu0 %1482
        %v1484 = vmul.f32 %v1483, %v1301
        %v1485 = vsub.f32 %v1478, %v1484
        %v1486 = vmul.f32 %v1485, %v1485
        %v1487 = vsel %vm636, %v1486, 0.0
        %1488 = vadd.xlane.f32.xlu0 %v1487
        %v1489 = vpop.xlane.xlu0 %1488
        %v1490 = vmul.f32 %v1489, %v1301
        %v1491 = vadd.f32 %v1490, 1e-05
        %v1492 = vrsqrt.pop %v1491
        %v1493 = vmul.f32 %v1485, %v1492
        %v1495 = vlaneseq
        %v1496 = vshrl.u32 %v1495, 7
        %v1497 = vsub.s32 0, %v1496
        %v1498 = vrot.slane %v1479, %v1497
        %v1500 = vmul.f32 %v1493, %v1498
        %v1502 = vlaneseq
        %v1503 = vshrl.u32 %v1502, 7
        %v1504 = vsub.s32 0, %v1503
        %v1505 = vrot.slane %v1480, %v1504
        %v1507 = vadd.f32 %v1500, %v1505
        %v1508 = vpack.c.bf16 %v1507, %v1507
        %vm1509 = vcmask 257024
        %1510 = vst.msk [vmem:[%s612] sm:$0xf] %vm1509, %v1508
        %s1511 = sand.u32 %s391, 1
        %s1512 = scalar_lea.sflag [#allocation5], %s1511
        %s1513 = sand.u32 %s391, 1
        %s1514 = smul.addr %s1513, 4
        %s1515 = scalar_lea.vmem [#allocation12], %s1514
        // Predicated region
        $region105: #{tpu_custom_call.1} parent=83 // pred_check
          %p1516 = pneg %p401
        $region106: #{tpu_custom_call.1} parent=83 // pred_check_branch
          %1518 = sbr.rel (%p1516) target = $region108
        $region107: #{tpu_custom_call.1} parent=83 // pred_region
          %s1520 = ssub.s32 64, 64
          %1521 = vsyncadd %s1512, %s1520
          %s1522 = smul.addr %s37, 64
          %s1523 = scalar_lea.hbm %s16, %s1522
          %s1525 = sshll.u32 %s1515, 4
          %s1526 = int_to_ptr.vmem [resolvable:$true] %s1525
          %1528 = dma.vmem_to_hbm [thread:$0]  %s1526, 64, %s1523, %s1512
        $region108: #{tpu_custom_call.1} parent=83 // pred_fallthru
          _
      $region84: #{tpu_custom_call.1} parent=5 // pred_fallthru
        _
      %p1529 = scmp.le.s32.totalorder 2, %s32
      // Predicated region
      $region109: #{tpu_custom_call.1} parent=5 // pred_check
        %p1530 = pneg %p1529
      $region110: #{tpu_custom_call.1} parent=5 // pred_check_branch
        %1532 = sbr.rel (%p1530) target = $region112
      $region111: #{tpu_custom_call.1} parent=5 // pred_region
        %s1533 = ssub.s32 %s32, 2
        // Predicated region
        $region113: #{tpu_custom_call.1} parent=111 // pred_check
          %p1534 = pneg %p407
        $region114: #{tpu_custom_call.1} parent=111 // pred_check_branch
          %1536 = sbr.rel (%p1534) target = $region116
        $region115: #{tpu_custom_call.1} parent=111 // pred_region
          %s1537 = sand.u32 %s392, 1
          %s1538 = scalar_lea.sflag [#allocation5], %s1537
          %s1539 = sand.u32 %s392, 1
          %s1540 = smul.addr %s1539, 4
          %s1541 = scalar_lea.vmem [#allocation12], %s1540
          %1542 = dma.done %s1538, 64
        $region116: #{tpu_custom_call.1} parent=111 // pred_fallthru
          _
      $region112: #{tpu_custom_call.1} parent=5 // pred_fallthru
        _
    $region6: #{tpu_custom_call.1} parent=1 // loop_footer
      %s36 = sadd.s32 1, %s32
    $region7: #{tpu_custom_call.1} parent=1 // loop_footer_branch
      %31 = sbr.rel target = $region3
    $region8: #{tpu_custom_call.1} parent=1 // loop_exit
      _
    %1543 = vsyncpa [#allocation4], 1
    %s1544 = scalar_lea.sflag [#allocation4], 1
    %1545 = vsyncpa %s1544, 1
    %1546 = vsyncpa [#allocation7], 1
    %s1547 = scalar_lea.sflag [#allocation7], 1
    %1548 = vsyncpa %s1547, 1
    %1549 = vsyncpa [#allocation10], 1
    %1550 = vsyncpa [#allocation5], 1
    %s1551 = scalar_lea.sflag [#allocation5], 1
    %1552 = vsyncpa %s1551, 1

</llo_original>
